<compile_context>
chip_gen: v7x
topology: tpu7x:2x2x1
jax: 0.10.0
libtpu: 0.0.40
codegen_flags: <defaults>
</compile_context>

<pallas_src>
import jax
import jax.numpy as jnp
from jax.experimental import pallas as pl
from jax.experimental.pallas import tpu as pltpu

INTERS = 5   # propagation iterations (module default)
N_MAPS = 5   # number of feature maps / gate groups


def _affinity_kernel(guid_ref, feat_ref, out_ref):
    # guid_ref: (1, 5, 5, TN)  -- group k, gate channel j, flattened spatial
    # feat_ref: (1, 5*C, TN)   -- 5 feature maps stacked on the sublane axis
    # out_ref : (1, 5*C, TN)
    n_maps = N_MAPS
    c = feat_ref.shape[1] // n_maps
    tn = feat_ref.shape[2]

    # ---- per-group softmax over the 5 gate channels (VPU + XLU + EUP) ----
    g = guid_ref[0]                                    # (5, 5, TN) f32
    m = jnp.max(g, axis=1, keepdims=True)              # (5, 1, TN)
    e = jnp.exp(g - m)                                 # (5, 5, TN)
    s = jnp.sum(e, axis=1, keepdims=True)              # (5, 1, TN)
    # exact reciprocal: gate errors compound through (I+G)^INTERS
    gates = e * pl.reciprocal(s, approx=False)         # (5, 5, TN)

    # ---- closed form: F_final = (I + G)^INTERS F, per pixel -------------
    # Row-block representation: rows[k] is (5, TN) holding row k of the
    # per-pixel 5x5 matrix (lane axis = pixel).
    row_idx = jax.lax.broadcasted_iota(jnp.int32, (n_maps, tn), 0)
    base = [gates[k] + (row_idx == k).astype(jnp.float32)   # (I + G) row k
            for k in range(n_maps)]

    def matmul_rows(a_rows, b_rows):
        # C[k, j] = sum_l A[k, l] * B[l, j]  (per pixel, elementwise on VPU)
        out_rows = []
        for k in range(n_maps):
            acc = a_rows[k][0:1, :] * b_rows[0]
            for l in range(1, n_maps):
                acc = acc + a_rows[k][l:l + 1, :] * b_rows[l]
            out_rows.append(acc)
        return out_rows

    def mat_power(rows, power):
        # exponentiation by squaring, unrolled at trace time
        assert power >= 1
        result = None
        while power > 0:
            if power & 1:
                result = rows if result is None else matmul_rows(result, rows)
            power >>= 1
            if power:
                rows = matmul_rows(rows, rows)
        return result

    mix = mat_power(base, INTERS)                      # rows of (I+G)^INTERS

    # ---- apply the mixing matrix to the stacked features ----------------
    feat = feat_ref[0]                                 # (5*C, TN)
    for k in range(n_maps):
        wk = mix[k]                                    # (5, TN)
        acc = wk[0:1, :] * feat[0:c, :]                # (C, TN)
        for j in range(1, n_maps):
            acc = acc + wk[j:j + 1, :] * feat[j * c:(j + 1) * c, :]
        out_ref[0, k * c:(k + 1) * c, :] = acc


def _pick_tile(n, c):
    """Largest lane tile (multiple of 128, <=2048) whose double-buffered
    in/out footprint (with 2x headroom) stays under ~16 MiB (v7x-safe)."""
    budget = 16 * 1024 * 1024
    cands = [t for t in (2048, 1024, 512, 256, 128)
             if 16 * t * (N_MAPS * N_MAPS + 2 * N_MAPS * c) <= budget]
    if not cands:
        cands = [128]
    for t in cands:                      # prefer a tile that divides N
        if n % t == 0:
            return t, n
    for t in cands:                      # otherwise pad N up to a multiple
        if t <= n:
            return t, ((n + t - 1) // t) * t
    t = cands[-1]
    return t, ((n + t - 1) // t) * t


def affinity_propagate(guidance, feature_maps):
    """guidance: (B, 25, H, W); feature_maps: list of 5 arrays (B, C, H, W)."""
    B, gc, H, W = guidance.shape
    assert gc == N_MAPS * N_MAPS
    C = feature_maps[0].shape[1]
    N = H * W

    # Lane-dense, contiguous HBM layouts.
    guid = guidance.reshape(B, N_MAPS, N_MAPS, N).astype(jnp.float32)
    feats = jnp.concatenate(
        [f.reshape(B, C, N) for f in feature_maps], axis=1
    ).astype(jnp.float32)                              # (B, 5*C, N)

    TN, Np = _pick_tile(N, C)
    if Np != N:
        pad = Np - N
        guid = jnp.pad(guid, ((0, 0), (0, 0), (0, 0), (0, pad)))
        feats = jnp.pad(feats, ((0, 0), (0, 0), (0, pad)))

    # Raise scoped VMEM only if the double-buffered working set needs it.
    db_bytes = 2 * 4 * TN * (N_MAPS * N_MAPS + 2 * N_MAPS * C)
    vmem_limit = None
    if 2 * db_bytes > 32 * 1024 * 1024:
        vmem_limit = min(2 * db_bytes, 64 * 1024 * 1024)

    grid = (B, Np // TN)
    out = pl.pallas_call(
        _affinity_kernel,
        out_shape=jax.ShapeDtypeStruct((B, N_MAPS * C, Np), jnp.float32),
        grid_spec=pltpu.PrefetchScalarGridSpec(
            num_scalar_prefetch=0,
            grid=grid,
            in_specs=[
                pl.BlockSpec((1, N_MAPS, N_MAPS, TN), lambda b, n: (b, 0, 0, n)),
                pl.BlockSpec((1, N_MAPS * C, TN), lambda b, n: (b, 0, n)),
            ],
            out_specs=pl.BlockSpec((1, N_MAPS * C, TN), lambda b, n: (b, 0, n)),
        ),
        # Donate the stacked feature slab into the output buffer.
        input_output_aliases={1: 0},
        compiler_params=pltpu.CompilerParams(
            dimension_semantics=("parallel", "parallel"),
            vmem_limit_bytes=vmem_limit,
        ),
    )(guid, feats)

    # Back to the list-of-NCHW convention of the PyTorch module.
    return [
        out[:, k * C:(k + 1) * C, :N].reshape(B, C, H, W)
        for k in range(N_MAPS)
    ]


def _reference(guidance, feature_maps, inters=INTERS):
    """Plain-JAX reference mirroring the PyTorch forward (iterative form)."""
    gates = [
        jax.nn.softmax(guidance[:, 5 * k:5 * k + 5], axis=1)
        for k in range(N_MAPS)
    ]
    feats = list(feature_maps)
    for _ in range(inters):
        new = []
        for k in range(N_MAPS):
            acc = feats[k]
            for j in range(N_MAPS):
                acc = acc + gates[k][:, j:j + 1] * feats[j]
            new.append(acc)
        feats = new
    return feats


if __name__ == "__main__":
    key = jax.random.PRNGKey(0)
    B, C, H, W = 2, 4, 16, 16
    kg, kf = jax.random.split(key)
    guidance = jax.random.normal(kg, (B, 25, H, W), dtype=jnp.float32)
    fkeys = jax.random.split(kf, N_MAPS)
    feature_maps = [
        jax.random.normal(fkeys[i], (B, C, H, W), dtype=jnp.float32)
        for i in range(N_MAPS)
    ]

    out = affinity_propagate(guidance, feature_maps)
    out = [jax.block_until_ready(o) for o in out]

    ref = _reference(guidance, feature_maps)
    for o, r in zip(out, ref):
        assert o.shape == (B, C, H, W)
        assert jnp.allclose(o, r, rtol=1e-4, atol=1e-4), "mismatch vs reference"

    print("KERNEL_OK")
</pallas_src>

<mosaic_0001>
module attributes {stable_mosaic.version = 11 : i64} {
  func.func @_affinity_kernel(%arg0: i32, %arg1: i32, %arg2: memref<1x5x5x256xf32, #tpu.memory_space<vmem>>, %arg3: memref<1x20x256xf32, #tpu.memory_space<vmem>>, %arg4: memref<1x20x256xf32, #tpu.memory_space<vmem>>) attributes {dimension_semantics = [#tpu.dimension_semantics<parallel>, #tpu.dimension_semantics<parallel>], iteration_bounds = array<i64: 2, 1>, scalar_prefetch = 0 : i64, scratch_operands = 0 : i64, tpu.core_type = #tpu.core_type<tc>, window_params = [{transform_indices = @transform_0, window_bounds = array<i64: 1, 5, 5, 256>}, {transform_indices = @transform_1, window_bounds = array<i64: 1, 20, 256>}, {transform_indices = @transform_2, window_bounds = array<i64: 1, 20, 256>}]} {
    %c0 = arith.constant 0 : index
    %c0_0 = arith.constant 0 : index
    %c0_1 = arith.constant 0 : index
    %c0_2 = arith.constant 0 : index
    %0 = vector.load %arg2[%c0, %c0_0, %c0_1, %c0_2] : memref<1x5x5x256xf32, #tpu.memory_space<vmem>>, vector<1x5x5x256xf32>
    %1 = vector.shape_cast %0 : vector<1x5x5x256xf32> to vector<5x5x256xf32>
    %cst = arith.constant dense<0xFF800000> : vector<5x256xf32>
    %2 = vector.multi_reduction <maximumf>, %1, %cst [1] : vector<5x5x256xf32> to vector<5x256xf32>
    %3 = vector.shape_cast %2 : vector<5x256xf32> to vector<5x1x256xf32>
    %4 = vector.broadcast %3 : vector<5x1x256xf32> to vector<5x5x256xf32>
    %5 = arith.subf %1, %4 : vector<5x5x256xf32>
    %6 = math.exp %5 : vector<5x5x256xf32>
    %cst_3 = arith.constant dense<0.000000e+00> : vector<5x256xf32>
    %7 = vector.multi_reduction <add>, %6, %cst_3 [1] : vector<5x5x256xf32> to vector<5x256xf32>
    %8 = vector.shape_cast %7 : vector<5x256xf32> to vector<5x1x256xf32>
    %9 = tpu.reciprocal %8 : vector<5x1x256xf32> -> vector<5x1x256xf32>
    %10 = vector.broadcast %9 : vector<5x1x256xf32> to vector<5x5x256xf32>
    %11 = arith.mulf %6, %10 : vector<5x5x256xf32>
    %12 = tpu.iota {dimensions = array<i32: 0>} : vector<5x256xi32>
    %13 = vector.extract_strided_slice %11 {offsets = [0, 0, 0], sizes = [1, 5, 256], strides = [1, 1, 1]} : vector<5x5x256xf32> to vector<1x5x256xf32>
    %14 = vector.shape_cast %13 : vector<1x5x256xf32> to vector<5x256xf32>
    %c0_i32 = arith.constant 0 : i32
    %15 = vector.broadcast %c0_i32 : i32 to vector<5x256xi32>
    %16 = arith.cmpi eq, %12, %15 : vector<5x256xi32>
    %17 = arith.extui %16 : vector<5x256xi1> to vector<5x256xi32>
    %18 = arith.sitofp %17 : vector<5x256xi32> to vector<5x256xf32>
    %19 = arith.addf %14, %18 : vector<5x256xf32>
    %20 = vector.extract_strided_slice %11 {offsets = [1, 0, 0], sizes = [1, 5, 256], strides = [1, 1, 1]} : vector<5x5x256xf32> to vector<1x5x256xf32>
    %21 = vector.shape_cast %20 : vector<1x5x256xf32> to vector<5x256xf32>
    %c1_i32 = arith.constant 1 : i32
    %22 = vector.broadcast %c1_i32 : i32 to vector<5x256xi32>
    %23 = arith.cmpi eq, %12, %22 : vector<5x256xi32>
    %24 = arith.extui %23 : vector<5x256xi1> to vector<5x256xi32>
    %25 = arith.sitofp %24 : vector<5x256xi32> to vector<5x256xf32>
    %26 = arith.addf %21, %25 : vector<5x256xf32>
    %27 = vector.extract_strided_slice %11 {offsets = [2, 0, 0], sizes = [1, 5, 256], strides = [1, 1, 1]} : vector<5x5x256xf32> to vector<1x5x256xf32>
    %28 = vector.shape_cast %27 : vector<1x5x256xf32> to vector<5x256xf32>
    %c2_i32 = arith.constant 2 : i32
    %29 = vector.broadcast %c2_i32 : i32 to vector<5x256xi32>
    %30 = arith.cmpi eq, %12, %29 : vector<5x256xi32>
    %31 = arith.extui %30 : vector<5x256xi1> to vector<5x256xi32>
    %32 = arith.sitofp %31 : vector<5x256xi32> to vector<5x256xf32>
    %33 = arith.addf %28, %32 : vector<5x256xf32>
    %34 = vector.extract_strided_slice %11 {offsets = [3, 0, 0], sizes = [1, 5, 256], strides = [1, 1, 1]} : vector<5x5x256xf32> to vector<1x5x256xf32>
    %35 = vector.shape_cast %34 : vector<1x5x256xf32> to vector<5x256xf32>
    %c3_i32 = arith.constant 3 : i32
    %36 = vector.broadcast %c3_i32 : i32 to vector<5x256xi32>
    %37 = arith.cmpi eq, %12, %36 : vector<5x256xi32>
    %38 = arith.extui %37 : vector<5x256xi1> to vector<5x256xi32>
    %39 = arith.sitofp %38 : vector<5x256xi32> to vector<5x256xf32>
    %40 = arith.addf %35, %39 : vector<5x256xf32>
    %41 = vector.extract_strided_slice %11 {offsets = [4, 0, 0], sizes = [1, 5, 256], strides = [1, 1, 1]} : vector<5x5x256xf32> to vector<1x5x256xf32>
    %42 = vector.shape_cast %41 : vector<1x5x256xf32> to vector<5x256xf32>
    %c4_i32 = arith.constant 4 : i32
    %43 = vector.broadcast %c4_i32 : i32 to vector<5x256xi32>
    %44 = arith.cmpi eq, %12, %43 : vector<5x256xi32>
    %45 = arith.extui %44 : vector<5x256xi1> to vector<5x256xi32>
    %46 = arith.sitofp %45 : vector<5x256xi32> to vector<5x256xf32>
    %47 = arith.addf %42, %46 : vector<5x256xf32>
    %48 = vector.extract_strided_slice %19 {offsets = [0, 0], sizes = [1, 256], strides = [1, 1]} : vector<5x256xf32> to vector<1x256xf32>
    %49 = vector.broadcast %48 : vector<1x256xf32> to vector<5x256xf32>
    %50 = arith.mulf %49, %19 : vector<5x256xf32>
    %51 = vector.extract_strided_slice %19 {offsets = [1, 0], sizes = [1, 256], strides = [1, 1]} : vector<5x256xf32> to vector<1x256xf32>
    %52 = vector.broadcast %51 : vector<1x256xf32> to vector<5x256xf32>
    %53 = arith.mulf %52, %26 : vector<5x256xf32>
    %54 = arith.addf %50, %53 : vector<5x256xf32>
    %55 = vector.extract_strided_slice %19 {offsets = [2, 0], sizes = [1, 256], strides = [1, 1]} : vector<5x256xf32> to vector<1x256xf32>
    %56 = vector.broadcast %55 : vector<1x256xf32> to vector<5x256xf32>
    %57 = arith.mulf %56, %33 : vector<5x256xf32>
    %58 = arith.addf %54, %57 : vector<5x256xf32>
    %59 = vector.extract_strided_slice %19 {offsets = [3, 0], sizes = [1, 256], strides = [1, 1]} : vector<5x256xf32> to vector<1x256xf32>
    %60 = vector.broadcast %59 : vector<1x256xf32> to vector<5x256xf32>
    %61 = arith.mulf %60, %40 : vector<5x256xf32>
    %62 = arith.addf %58, %61 : vector<5x256xf32>
    %63 = vector.extract_strided_slice %19 {offsets = [4, 0], sizes = [1, 256], strides = [1, 1]} : vector<5x256xf32> to vector<1x256xf32>
    %64 = vector.broadcast %63 : vector<1x256xf32> to vector<5x256xf32>
    %65 = arith.mulf %64, %47 : vector<5x256xf32>
    %66 = arith.addf %62, %65 : vector<5x256xf32>
    %67 = vector.extract_strided_slice %26 {offsets = [0, 0], sizes = [1, 256], strides = [1, 1]} : vector<5x256xf32> to vector<1x256xf32>
    %68 = vector.broadcast %67 : vector<1x256xf32> to vector<5x256xf32>
    %69 = arith.mulf %68, %19 : vector<5x256xf32>
    %70 = vector.extract_strided_slice %26 {offsets = [1, 0], sizes = [1, 256], strides = [1, 1]} : vector<5x256xf32> to vector<1x256xf32>
    %71 = vector.broadcast %70 : vector<1x256xf32> to vector<5x256xf32>
    %72 = arith.mulf %71, %26 : vector<5x256xf32>
    %73 = arith.addf %69, %72 : vector<5x256xf32>
    %74 = vector.extract_strided_slice %26 {offsets = [2, 0], sizes = [1, 256], strides = [1, 1]} : vector<5x256xf32> to vector<1x256xf32>
    %75 = vector.broadcast %74 : vector<1x256xf32> to vector<5x256xf32>
    %76 = arith.mulf %75, %33 : vector<5x256xf32>
    %77 = arith.addf %73, %76 : vector<5x256xf32>
    %78 = vector.extract_strided_slice %26 {offsets = [3, 0], sizes = [1, 256], strides = [1, 1]} : vector<5x256xf32> to vector<1x256xf32>
    %79 = vector.broadcast %78 : vector<1x256xf32> to vector<5x256xf32>
    %80 = arith.mulf %79, %40 : vector<5x256xf32>
    %81 = arith.addf %77, %80 : vector<5x256xf32>
    %82 = vector.extract_strided_slice %26 {offsets = [4, 0], sizes = [1, 256], strides = [1, 1]} : vector<5x256xf32> to vector<1x256xf32>
    %83 = vector.broadcast %82 : vector<1x256xf32> to vector<5x256xf32>
    %84 = arith.mulf %83, %47 : vector<5x256xf32>
    %85 = arith.addf %81, %84 : vector<5x256xf32>
    %86 = vector.extract_strided_slice %33 {offsets = [0, 0], sizes = [1, 256], strides = [1, 1]} : vector<5x256xf32> to vector<1x256xf32>
    %87 = vector.broadcast %86 : vector<1x256xf32> to vector<5x256xf32>
    %88 = arith.mulf %87, %19 : vector<5x256xf32>
    %89 = vector.extract_strided_slice %33 {offsets = [1, 0], sizes = [1, 256], strides = [1, 1]} : vector<5x256xf32> to vector<1x256xf32>
    %90 = vector.broadcast %89 : vector<1x256xf32> to vector<5x256xf32>
    %91 = arith.mulf %90, %26 : vector<5x256xf32>
    %92 = arith.addf %88, %91 : vector<5x256xf32>
    %93 = vector.extract_strided_slice %33 {offsets = [2, 0], sizes = [1, 256], strides = [1, 1]} : vector<5x256xf32> to vector<1x256xf32>
    %94 = vector.broadcast %93 : vector<1x256xf32> to vector<5x256xf32>
    %95 = arith.mulf %94, %33 : vector<5x256xf32>
    %96 = arith.addf %92, %95 : vector<5x256xf32>
    %97 = vector.extract_strided_slice %33 {offsets = [3, 0], sizes = [1, 256], strides = [1, 1]} : vector<5x256xf32> to vector<1x256xf32>
    %98 = vector.broadcast %97 : vector<1x256xf32> to vector<5x256xf32>
    %99 = arith.mulf %98, %40 : vector<5x256xf32>
    %100 = arith.addf %96, %99 : vector<5x256xf32>
    %101 = vector.extract_strided_slice %33 {offsets = [4, 0], sizes = [1, 256], strides = [1, 1]} : vector<5x256xf32> to vector<1x256xf32>
    %102 = vector.broadcast %101 : vector<1x256xf32> to vector<5x256xf32>
    %103 = arith.mulf %102, %47 : vector<5x256xf32>
    %104 = arith.addf %100, %103 : vector<5x256xf32>
    %105 = vector.extract_strided_slice %40 {offsets = [0, 0], sizes = [1, 256], strides = [1, 1]} : vector<5x256xf32> to vector<1x256xf32>
    %106 = vector.broadcast %105 : vector<1x256xf32> to vector<5x256xf32>
    %107 = arith.mulf %106, %19 : vector<5x256xf32>
    %108 = vector.extract_strided_slice %40 {offsets = [1, 0], sizes = [1, 256], strides = [1, 1]} : vector<5x256xf32> to vector<1x256xf32>
    %109 = vector.broadcast %108 : vector<1x256xf32> to vector<5x256xf32>
    %110 = arith.mulf %109, %26 : vector<5x256xf32>
    %111 = arith.addf %107, %110 : vector<5x256xf32>
    %112 = vector.extract_strided_slice %40 {offsets = [2, 0], sizes = [1, 256], strides = [1, 1]} : vector<5x256xf32> to vector<1x256xf32>
    %113 = vector.broadcast %112 : vector<1x256xf32> to vector<5x256xf32>
    %114 = arith.mulf %113, %33 : vector<5x256xf32>
    %115 = arith.addf %111, %114 : vector<5x256xf32>
    %116 = vector.extract_strided_slice %40 {offsets = [3, 0], sizes = [1, 256], strides = [1, 1]} : vector<5x256xf32> to vector<1x256xf32>
    %117 = vector.broadcast %116 : vector<1x256xf32> to vector<5x256xf32>
    %118 = arith.mulf %117, %40 : vector<5x256xf32>
    %119 = arith.addf %115, %118 : vector<5x256xf32>
    %120 = vector.extract_strided_slice %40 {offsets = [4, 0], sizes = [1, 256], strides = [1, 1]} : vector<5x256xf32> to vector<1x256xf32>
    %121 = vector.broadcast %120 : vector<1x256xf32> to vector<5x256xf32>
    %122 = arith.mulf %121, %47 : vector<5x256xf32>
    %123 = arith.addf %119, %122 : vector<5x256xf32>
    %124 = vector.extract_strided_slice %47 {offsets = [0, 0], sizes = [1, 256], strides = [1, 1]} : vector<5x256xf32> to vector<1x256xf32>
    %125 = vector.broadcast %124 : vector<1x256xf32> to vector<5x256xf32>
    %126 = arith.mulf %125, %19 : vector<5x256xf32>
    %127 = vector.extract_strided_slice %47 {offsets = [1, 0], sizes = [1, 256], strides = [1, 1]} : vector<5x256xf32> to vector<1x256xf32>
    %128 = vector.broadcast %127 : vector<1x256xf32> to vector<5x256xf32>
    %129 = arith.mulf %128, %26 : vector<5x256xf32>
    %130 = arith.addf %126, %129 : vector<5x256xf32>
    %131 = vector.extract_strided_slice %47 {offsets = [2, 0], sizes = [1, 256], strides = [1, 1]} : vector<5x256xf32> to vector<1x256xf32>
    %132 = vector.broadcast %131 : vector<1x256xf32> to vector<5x256xf32>
    %133 = arith.mulf %132, %33 : vector<5x256xf32>
    %134 = arith.addf %130, %133 : vector<5x256xf32>
    %135 = vector.extract_strided_slice %47 {offsets = [3, 0], sizes = [1, 256], strides = [1, 1]} : vector<5x256xf32> to vector<1x256xf32>
    %136 = vector.broadcast %135 : vector<1x256xf32> to vector<5x256xf32>
    %137 = arith.mulf %136, %40 : vector<5x256xf32>
    %138 = arith.addf %134, %137 : vector<5x256xf32>
    %139 = vector.extract_strided_slice %47 {offsets = [4, 0], sizes = [1, 256], strides = [1, 1]} : vector<5x256xf32> to vector<1x256xf32>
    %140 = vector.broadcast %139 : vector<1x256xf32> to vector<5x256xf32>
    %141 = arith.mulf %140, %47 : vector<5x256xf32>
    %142 = arith.addf %138, %141 : vector<5x256xf32>
    %143 = vector.extract_strided_slice %66 {offsets = [0, 0], sizes = [1, 256], strides = [1, 1]} : vector<5x256xf32> to vector<1x256xf32>
    %144 = vector.broadcast %143 : vector<1x256xf32> to vector<5x256xf32>
    %145 = arith.mulf %144, %66 : vector<5x256xf32>
    %146 = vector.extract_strided_slice %66 {offsets = [1, 0], sizes = [1, 256], strides = [1, 1]} : vector<5x256xf32> to vector<1x256xf32>
    %147 = vector.broadcast %146 : vector<1x256xf32> to vector<5x256xf32>
    %148 = arith.mulf %147, %85 : vector<5x256xf32>
    %149 = arith.addf %145, %148 : vector<5x256xf32>
    %150 = vector.extract_strided_slice %66 {offsets = [2, 0], sizes = [1, 256], strides = [1, 1]} : vector<5x256xf32> to vector<1x256xf32>
    %151 = vector.broadcast %150 : vector<1x256xf32> to vector<5x256xf32>
    %152 = arith.mulf %151, %104 : vector<5x256xf32>
    %153 = arith.addf %149, %152 : vector<5x256xf32>
    %154 = vector.extract_strided_slice %66 {offsets = [3, 0], sizes = [1, 256], strides = [1, 1]} : vector<5x256xf32> to vector<1x256xf32>
    %155 = vector.broadcast %154 : vector<1x256xf32> to vector<5x256xf32>
    %156 = arith.mulf %155, %123 : vector<5x256xf32>
    %157 = arith.addf %153, %156 : vector<5x256xf32>
    %158 = vector.extract_strided_slice %66 {offsets = [4, 0], sizes = [1, 256], strides = [1, 1]} : vector<5x256xf32> to vector<1x256xf32>
    %159 = vector.broadcast %158 : vector<1x256xf32> to vector<5x256xf32>
    %160 = arith.mulf %159, %142 : vector<5x256xf32>
    %161 = arith.addf %157, %160 : vector<5x256xf32>
    %162 = vector.extract_strided_slice %85 {offsets = [0, 0], sizes = [1, 256], strides = [1, 1]} : vector<5x256xf32> to vector<1x256xf32>
    %163 = vector.broadcast %162 : vector<1x256xf32> to vector<5x256xf32>
    %164 = arith.mulf %163, %66 : vector<5x256xf32>
    %165 = vector.extract_strided_slice %85 {offsets = [1, 0], sizes = [1, 256], strides = [1, 1]} : vector<5x256xf32> to vector<1x256xf32>
    %166 = vector.broadcast %165 : vector<1x256xf32> to vector<5x256xf32>
    %167 = arith.mulf %166, %85 : vector<5x256xf32>
    %168 = arith.addf %164, %167 : vector<5x256xf32>
    %169 = vector.extract_strided_slice %85 {offsets = [2, 0], sizes = [1, 256], strides = [1, 1]} : vector<5x256xf32> to vector<1x256xf32>
    %170 = vector.broadcast %169 : vector<1x256xf32> to vector<5x256xf32>
    %171 = arith.mulf %170, %104 : vector<5x256xf32>
    %172 = arith.addf %168, %171 : vector<5x256xf32>
    %173 = vector.extract_strided_slice %85 {offsets = [3, 0], sizes = [1, 256], strides = [1, 1]} : vector<5x256xf32> to vector<1x256xf32>
    %174 = vector.broadcast %173 : vector<1x256xf32> to vector<5x256xf32>
    %175 = arith.mulf %174, %123 : vector<5x256xf32>
    %176 = arith.addf %172, %175 : vector<5x256xf32>
    %177 = vector.extract_strided_slice %85 {offsets = [4, 0], sizes = [1, 256], strides = [1, 1]} : vector<5x256xf32> to vector<1x256xf32>
    %178 = vector.broadcast %177 : vector<1x256xf32> to vector<5x256xf32>
    %179 = arith.mulf %178, %142 : vector<5x256xf32>
    %180 = arith.addf %176, %179 : vector<5x256xf32>
    %181 = vector.extract_strided_slice %104 {offsets = [0, 0], sizes = [1, 256], strides = [1, 1]} : vector<5x256xf32> to vector<1x256xf32>
    %182 = vector.broadcast %181 : vector<1x256xf32> to vector<5x256xf32>
    %183 = arith.mulf %182, %66 : vector<5x256xf32>
    %184 = vector.extract_strided_slice %104 {offsets = [1, 0], sizes = [1, 256], strides = [1, 1]} : vector<5x256xf32> to vector<1x256xf32>
    %185 = vector.broadcast %184 : vector<1x256xf32> to vector<5x256xf32>
    %186 = arith.mulf %185, %85 : vector<5x256xf32>
    %187 = arith.addf %183, %186 : vector<5x256xf32>
    %188 = vector.extract_strided_slice %104 {offsets = [2, 0], sizes = [1, 256], strides = [1, 1]} : vector<5x256xf32> to vector<1x256xf32>
    %189 = vector.broadcast %188 : vector<1x256xf32> to vector<5x256xf32>
    %190 = arith.mulf %189, %104 : vector<5x256xf32>
    %191 = arith.addf %187, %190 : vector<5x256xf32>
    %192 = vector.extract_strided_slice %104 {offsets = [3, 0], sizes = [1, 256], strides = [1, 1]} : vector<5x256xf32> to vector<1x256xf32>
    %193 = vector.broadcast %192 : vector<1x256xf32> to vector<5x256xf32>
    %194 = arith.mulf %193, %123 : vector<5x256xf32>
    %195 = arith.addf %191, %194 : vector<5x256xf32>
    %196 = vector.extract_strided_slice %104 {offsets = [4, 0], sizes = [1, 256], strides = [1, 1]} : vector<5x256xf32> to vector<1x256xf32>
    %197 = vector.broadcast %196 : vector<1x256xf32> to vector<5x256xf32>
    %198 = arith.mulf %197, %142 : vector<5x256xf32>
    %199 = arith.addf %195, %198 : vector<5x256xf32>
    %200 = vector.extract_strided_slice %123 {offsets = [0, 0], sizes = [1, 256], strides = [1, 1]} : vector<5x256xf32> to vector<1x256xf32>
    %201 = vector.broadcast %200 : vector<1x256xf32> to vector<5x256xf32>
    %202 = arith.mulf %201, %66 : vector<5x256xf32>
    %203 = vector.extract_strided_slice %123 {offsets = [1, 0], sizes = [1, 256], strides = [1, 1]} : vector<5x256xf32> to vector<1x256xf32>
    %204 = vector.broadcast %203 : vector<1x256xf32> to vector<5x256xf32>
    %205 = arith.mulf %204, %85 : vector<5x256xf32>
    %206 = arith.addf %202, %205 : vector<5x256xf32>
    %207 = vector.extract_strided_slice %123 {offsets = [2, 0], sizes = [1, 256], strides = [1, 1]} : vector<5x256xf32> to vector<1x256xf32>
    %208 = vector.broadcast %207 : vector<1x256xf32> to vector<5x256xf32>
    %209 = arith.mulf %208, %104 : vector<5x256xf32>
    %210 = arith.addf %206, %209 : vector<5x256xf32>
    %211 = vector.extract_strided_slice %123 {offsets = [3, 0], sizes = [1, 256], strides = [1, 1]} : vector<5x256xf32> to vector<1x256xf32>
    %212 = vector.broadcast %211 : vector<1x256xf32> to vector<5x256xf32>
    %213 = arith.mulf %212, %123 : vector<5x256xf32>
    %214 = arith.addf %210, %213 : vector<5x256xf32>
    %215 = vector.extract_strided_slice %123 {offsets = [4, 0], sizes = [1, 256], strides = [1, 1]} : vector<5x256xf32> to vector<1x256xf32>
    %216 = vector.broadcast %215 : vector<1x256xf32> to vector<5x256xf32>
    %217 = arith.mulf %216, %142 : vector<5x256xf32>
    %218 = arith.addf %214, %217 : vector<5x256xf32>
    %219 = vector.extract_strided_slice %142 {offsets = [0, 0], sizes = [1, 256], strides = [1, 1]} : vector<5x256xf32> to vector<1x256xf32>
    %220 = vector.broadcast %219 : vector<1x256xf32> to vector<5x256xf32>
    %221 = arith.mulf %220, %66 : vector<5x256xf32>
    %222 = vector.extract_strided_slice %142 {offsets = [1, 0], sizes = [1, 256], strides = [1, 1]} : vector<5x256xf32> to vector<1x256xf32>
    %223 = vector.broadcast %222 : vector<1x256xf32> to vector<5x256xf32>
    %224 = arith.mulf %223, %85 : vector<5x256xf32>
    %225 = arith.addf %221, %224 : vector<5x256xf32>
    %226 = vector.extract_strided_slice %142 {offsets = [2, 0], sizes = [1, 256], strides = [1, 1]} : vector<5x256xf32> to vector<1x256xf32>
    %227 = vector.broadcast %226 : vector<1x256xf32> to vector<5x256xf32>
    %228 = arith.mulf %227, %104 : vector<5x256xf32>
    %229 = arith.addf %225, %228 : vector<5x256xf32>
    %230 = vector.extract_strided_slice %142 {offsets = [3, 0], sizes = [1, 256], strides = [1, 1]} : vector<5x256xf32> to vector<1x256xf32>
    %231 = vector.broadcast %230 : vector<1x256xf32> to vector<5x256xf32>
    %232 = arith.mulf %231, %123 : vector<5x256xf32>
    %233 = arith.addf %229, %232 : vector<5x256xf32>
    %234 = vector.extract_strided_slice %142 {offsets = [4, 0], sizes = [1, 256], strides = [1, 1]} : vector<5x256xf32> to vector<1x256xf32>
    %235 = vector.broadcast %234 : vector<1x256xf32> to vector<5x256xf32>
    %236 = arith.mulf %235, %142 : vector<5x256xf32>
    %237 = arith.addf %233, %236 : vector<5x256xf32>
    %238 = vector.extract_strided_slice %19 {offsets = [0, 0], sizes = [1, 256], strides = [1, 1]} : vector<5x256xf32> to vector<1x256xf32>
    %239 = vector.broadcast %238 : vector<1x256xf32> to vector<5x256xf32>
    %240 = arith.mulf %239, %161 : vector<5x256xf32>
    %241 = vector.extract_strided_slice %19 {offsets = [1, 0], sizes = [1, 256], strides = [1, 1]} : vector<5x256xf32> to vector<1x256xf32>
    %242 = vector.broadcast %241 : vector<1x256xf32> to vector<5x256xf32>
    %243 = arith.mulf %242, %180 : vector<5x256xf32>
    %244 = arith.addf %240, %243 : vector<5x256xf32>
    %245 = vector.extract_strided_slice %19 {offsets = [2, 0], sizes = [1, 256], strides = [1, 1]} : vector<5x256xf32> to vector<1x256xf32>
    %246 = vector.broadcast %245 : vector<1x256xf32> to vector<5x256xf32>
    %247 = arith.mulf %246, %199 : vector<5x256xf32>
    %248 = arith.addf %244, %247 : vector<5x256xf32>
    %249 = vector.extract_strided_slice %19 {offsets = [3, 0], sizes = [1, 256], strides = [1, 1]} : vector<5x256xf32> to vector<1x256xf32>
    %250 = vector.broadcast %249 : vector<1x256xf32> to vector<5x256xf32>
    %251 = arith.mulf %250, %218 : vector<5x256xf32>
    %252 = arith.addf %248, %251 : vector<5x256xf32>
    %253 = vector.extract_strided_slice %19 {offsets = [4, 0], sizes = [1, 256], strides = [1, 1]} : vector<5x256xf32> to vector<1x256xf32>
    %254 = vector.broadcast %253 : vector<1x256xf32> to vector<5x256xf32>
    %255 = arith.mulf %254, %237 : vector<5x256xf32>
    %256 = arith.addf %252, %255 : vector<5x256xf32>
    %257 = vector.extract_strided_slice %26 {offsets = [0, 0], sizes = [1, 256], strides = [1, 1]} : vector<5x256xf32> to vector<1x256xf32>
    %258 = vector.broadcast %257 : vector<1x256xf32> to vector<5x256xf32>
    %259 = arith.mulf %258, %161 : vector<5x256xf32>
    %260 = vector.extract_strided_slice %26 {offsets = [1, 0], sizes = [1, 256], strides = [1, 1]} : vector<5x256xf32> to vector<1x256xf32>
    %261 = vector.broadcast %260 : vector<1x256xf32> to vector<5x256xf32>
    %262 = arith.mulf %261, %180 : vector<5x256xf32>
    %263 = arith.addf %259, %262 : vector<5x256xf32>
    %264 = vector.extract_strided_slice %26 {offsets = [2, 0], sizes = [1, 256], strides = [1, 1]} : vector<5x256xf32> to vector<1x256xf32>
    %265 = vector.broadcast %264 : vector<1x256xf32> to vector<5x256xf32>
    %266 = arith.mulf %265, %199 : vector<5x256xf32>
    %267 = arith.addf %263, %266 : vector<5x256xf32>
    %268 = vector.extract_strided_slice %26 {offsets = [3, 0], sizes = [1, 256], strides = [1, 1]} : vector<5x256xf32> to vector<1x256xf32>
    %269 = vector.broadcast %268 : vector<1x256xf32> to vector<5x256xf32>
    %270 = arith.mulf %269, %218 : vector<5x256xf32>
    %271 = arith.addf %267, %270 : vector<5x256xf32>
    %272 = vector.extract_strided_slice %26 {offsets = [4, 0], sizes = [1, 256], strides = [1, 1]} : vector<5x256xf32> to vector<1x256xf32>
    %273 = vector.broadcast %272 : vector<1x256xf32> to vector<5x256xf32>
    %274 = arith.mulf %273, %237 : vector<5x256xf32>
    %275 = arith.addf %271, %274 : vector<5x256xf32>
    %276 = vector.extract_strided_slice %33 {offsets = [0, 0], sizes = [1, 256], strides = [1, 1]} : vector<5x256xf32> to vector<1x256xf32>
    %277 = vector.broadcast %276 : vector<1x256xf32> to vector<5x256xf32>
    %278 = arith.mulf %277, %161 : vector<5x256xf32>
    %279 = vector.extract_strided_slice %33 {offsets = [1, 0], sizes = [1, 256], strides = [1, 1]} : vector<5x256xf32> to vector<1x256xf32>
    %280 = vector.broadcast %279 : vector<1x256xf32> to vector<5x256xf32>
    %281 = arith.mulf %280, %180 : vector<5x256xf32>
    %282 = arith.addf %278, %281 : vector<5x256xf32>
    %283 = vector.extract_strided_slice %33 {offsets = [2, 0], sizes = [1, 256], strides = [1, 1]} : vector<5x256xf32> to vector<1x256xf32>
    %284 = vector.broadcast %283 : vector<1x256xf32> to vector<5x256xf32>
    %285 = arith.mulf %284, %199 : vector<5x256xf32>
    %286 = arith.addf %282, %285 : vector<5x256xf32>
    %287 = vector.extract_strided_slice %33 {offsets = [3, 0], sizes = [1, 256], strides = [1, 1]} : vector<5x256xf32> to vector<1x256xf32>
    %288 = vector.broadcast %287 : vector<1x256xf32> to vector<5x256xf32>
    %289 = arith.mulf %288, %218 : vector<5x256xf32>
    %290 = arith.addf %286, %289 : vector<5x256xf32>
    %291 = vector.extract_strided_slice %33 {offsets = [4, 0], sizes = [1, 256], strides = [1, 1]} : vector<5x256xf32> to vector<1x256xf32>
    %292 = vector.broadcast %291 : vector<1x256xf32> to vector<5x256xf32>
    %293 = arith.mulf %292, %237 : vector<5x256xf32>
    %294 = arith.addf %290, %293 : vector<5x256xf32>
    %295 = vector.extract_strided_slice %40 {offsets = [0, 0], sizes = [1, 256], strides = [1, 1]} : vector<5x256xf32> to vector<1x256xf32>
    %296 = vector.broadcast %295 : vector<1x256xf32> to vector<5x256xf32>
    %297 = arith.mulf %296, %161 : vector<5x256xf32>
    %298 = vector.extract_strided_slice %40 {offsets = [1, 0], sizes = [1, 256], strides = [1, 1]} : vector<5x256xf32> to vector<1x256xf32>
    %299 = vector.broadcast %298 : vector<1x256xf32> to vector<5x256xf32>
    %300 = arith.mulf %299, %180 : vector<5x256xf32>
    %301 = arith.addf %297, %300 : vector<5x256xf32>
    %302 = vector.extract_strided_slice %40 {offsets = [2, 0], sizes = [1, 256], strides = [1, 1]} : vector<5x256xf32> to vector<1x256xf32>
    %303 = vector.broadcast %302 : vector<1x256xf32> to vector<5x256xf32>
    %304 = arith.mulf %303, %199 : vector<5x256xf32>
    %305 = arith.addf %301, %304 : vector<5x256xf32>
    %306 = vector.extract_strided_slice %40 {offsets = [3, 0], sizes = [1, 256], strides = [1, 1]} : vector<5x256xf32> to vector<1x256xf32>
    %307 = vector.broadcast %306 : vector<1x256xf32> to vector<5x256xf32>
    %308 = arith.mulf %307, %218 : vector<5x256xf32>
    %309 = arith.addf %305, %308 : vector<5x256xf32>
    %310 = vector.extract_strided_slice %40 {offsets = [4, 0], sizes = [1, 256], strides = [1, 1]} : vector<5x256xf32> to vector<1x256xf32>
    %311 = vector.broadcast %310 : vector<1x256xf32> to vector<5x256xf32>
    %312 = arith.mulf %311, %237 : vector<5x256xf32>
    %313 = arith.addf %309, %312 : vector<5x256xf32>
    %314 = vector.extract_strided_slice %47 {offsets = [0, 0], sizes = [1, 256], strides = [1, 1]} : vector<5x256xf32> to vector<1x256xf32>
    %315 = vector.broadcast %314 : vector<1x256xf32> to vector<5x256xf32>
    %316 = arith.mulf %315, %161 : vector<5x256xf32>
    %317 = vector.extract_strided_slice %47 {offsets = [1, 0], sizes = [1, 256], strides = [1, 1]} : vector<5x256xf32> to vector<1x256xf32>
    %318 = vector.broadcast %317 : vector<1x256xf32> to vector<5x256xf32>
    %319 = arith.mulf %318, %180 : vector<5x256xf32>
    %320 = arith.addf %316, %319 : vector<5x256xf32>
    %321 = vector.extract_strided_slice %47 {offsets = [2, 0], sizes = [1, 256], strides = [1, 1]} : vector<5x256xf32> to vector<1x256xf32>
    %322 = vector.broadcast %321 : vector<1x256xf32> to vector<5x256xf32>
    %323 = arith.mulf %322, %199 : vector<5x256xf32>
    %324 = arith.addf %320, %323 : vector<5x256xf32>
    %325 = vector.extract_strided_slice %47 {offsets = [3, 0], sizes = [1, 256], strides = [1, 1]} : vector<5x256xf32> to vector<1x256xf32>
    %326 = vector.broadcast %325 : vector<1x256xf32> to vector<5x256xf32>
    %327 = arith.mulf %326, %218 : vector<5x256xf32>
    %328 = arith.addf %324, %327 : vector<5x256xf32>
    %329 = vector.extract_strided_slice %47 {offsets = [4, 0], sizes = [1, 256], strides = [1, 1]} : vector<5x256xf32> to vector<1x256xf32>
    %330 = vector.broadcast %329 : vector<1x256xf32> to vector<5x256xf32>
    %331 = arith.mulf %330, %237 : vector<5x256xf32>
    %332 = arith.addf %328, %331 : vector<5x256xf32>
    %c0_4 = arith.constant 0 : index
    %c0_5 = arith.constant 0 : index
    %c0_6 = arith.constant 0 : index
    %333 = vector.load %arg3[%c0_4, %c0_5, %c0_6] : memref<1x20x256xf32, #tpu.memory_space<vmem>>, vector<1x20x256xf32>
    %334 = vector.shape_cast %333 : vector<1x20x256xf32> to vector<20x256xf32>
    %335 = vector.extract_strided_slice %256 {offsets = [0, 0], sizes = [1, 256], strides = [1, 1]} : vector<5x256xf32> to vector<1x256xf32>
    %336 = vector.extract_strided_slice %334 {offsets = [0, 0], sizes = [4, 256], strides = [1, 1]} : vector<20x256xf32> to vector<4x256xf32>
    %337 = vector.broadcast %335 : vector<1x256xf32> to vector<4x256xf32>
    %338 = arith.mulf %337, %336 : vector<4x256xf32>
    %339 = vector.extract_strided_slice %256 {offsets = [1, 0], sizes = [1, 256], strides = [1, 1]} : vector<5x256xf32> to vector<1x256xf32>
    %340 = vector.extract_strided_slice %334 {offsets = [4, 0], sizes = [4, 256], strides = [1, 1]} : vector<20x256xf32> to vector<4x256xf32>
    %341 = vector.broadcast %339 : vector<1x256xf32> to vector<4x256xf32>
    %342 = arith.mulf %341, %340 : vector<4x256xf32>
    %343 = arith.addf %338, %342 : vector<4x256xf32>
    %344 = vector.extract_strided_slice %256 {offsets = [2, 0], sizes = [1, 256], strides = [1, 1]} : vector<5x256xf32> to vector<1x256xf32>
    %345 = vector.extract_strided_slice %334 {offsets = [8, 0], sizes = [4, 256], strides = [1, 1]} : vector<20x256xf32> to vector<4x256xf32>
    %346 = vector.broadcast %344 : vector<1x256xf32> to vector<4x256xf32>
    %347 = arith.mulf %346, %345 : vector<4x256xf32>
    %348 = arith.addf %343, %347 : vector<4x256xf32>
    %349 = vector.extract_strided_slice %256 {offsets = [3, 0], sizes = [1, 256], strides = [1, 1]} : vector<5x256xf32> to vector<1x256xf32>
    %350 = vector.extract_strided_slice %334 {offsets = [12, 0], sizes = [4, 256], strides = [1, 1]} : vector<20x256xf32> to vector<4x256xf32>
    %351 = vector.broadcast %349 : vector<1x256xf32> to vector<4x256xf32>
    %352 = arith.mulf %351, %350 : vector<4x256xf32>
    %353 = arith.addf %348, %352 : vector<4x256xf32>
    %354 = vector.extract_strided_slice %256 {offsets = [4, 0], sizes = [1, 256], strides = [1, 1]} : vector<5x256xf32> to vector<1x256xf32>
    %355 = vector.extract_strided_slice %334 {offsets = [16, 0], sizes = [4, 256], strides = [1, 1]} : vector<20x256xf32> to vector<4x256xf32>
    %356 = vector.broadcast %354 : vector<1x256xf32> to vector<4x256xf32>
    %357 = arith.mulf %356, %355 : vector<4x256xf32>
    %358 = arith.addf %353, %357 : vector<4x256xf32>
    %c0_7 = arith.constant 0 : index
    %c0_8 = arith.constant 0 : index
    %c0_9 = arith.constant 0 : index
    %359 = vector.load %arg4[%c0_7, %c0_8, %c0_9] : memref<1x20x256xf32, #tpu.memory_space<vmem>>, vector<1x4x256xf32>
    %360 = vector.shape_cast %359 : vector<1x4x256xf32> to vector<4x256xf32>
    %361 = vector.shape_cast %358 : vector<4x256xf32> to vector<1x4x256xf32>
    tpu.vector_store %arg4[%c0_7, %c0_8, %c0_9], %361 {strides = array<i32>} : memref<1x20x256xf32, #tpu.memory_space<vmem>>, vector<1x4x256xf32>,
    %362 = vector.extract_strided_slice %275 {offsets = [0, 0], sizes = [1, 256], strides = [1, 1]} : vector<5x256xf32> to vector<1x256xf32>
    %363 = vector.extract_strided_slice %334 {offsets = [0, 0], sizes = [4, 256], strides = [1, 1]} : vector<20x256xf32> to vector<4x256xf32>
    %364 = vector.broadcast %362 : vector<1x256xf32> to vector<4x256xf32>
    %365 = arith.mulf %364, %363 : vector<4x256xf32>
    %366 = vector.extract_strided_slice %275 {offsets = [1, 0], sizes = [1, 256], strides = [1, 1]} : vector<5x256xf32> to vector<1x256xf32>
    %367 = vector.extract_strided_slice %334 {offsets = [4, 0], sizes = [4, 256], strides = [1, 1]} : vector<20x256xf32> to vector<4x256xf32>
    %368 = vector.broadcast %366 : vector<1x256xf32> to vector<4x256xf32>
    %369 = arith.mulf %368, %367 : vector<4x256xf32>
    %370 = arith.addf %365, %369 : vector<4x256xf32>
    %371 = vector.extract_strided_slice %275 {offsets = [2, 0], sizes = [1, 256], strides = [1, 1]} : vector<5x256xf32> to vector<1x256xf32>
    %372 = vector.extract_strided_slice %334 {offsets = [8, 0], sizes = [4, 256], strides = [1, 1]} : vector<20x256xf32> to vector<4x256xf32>
    %373 = vector.broadcast %371 : vector<1x256xf32> to vector<4x256xf32>
    %374 = arith.mulf %373, %372 : vector<4x256xf32>
    %375 = arith.addf %370, %374 : vector<4x256xf32>
    %376 = vector.extract_strided_slice %275 {offsets = [3, 0], sizes = [1, 256], strides = [1, 1]} : vector<5x256xf32> to vector<1x256xf32>
    %377 = vector.extract_strided_slice %334 {offsets = [12, 0], sizes = [4, 256], strides = [1, 1]} : vector<20x256xf32> to vector<4x256xf32>
    %378 = vector.broadcast %376 : vector<1x256xf32> to vector<4x256xf32>
    %379 = arith.mulf %378, %377 : vector<4x256xf32>
    %380 = arith.addf %375, %379 : vector<4x256xf32>
    %381 = vector.extract_strided_slice %275 {offsets = [4, 0], sizes = [1, 256], strides = [1, 1]} : vector<5x256xf32> to vector<1x256xf32>
    %382 = vector.extract_strided_slice %334 {offsets = [16, 0], sizes = [4, 256], strides = [1, 1]} : vector<20x256xf32> to vector<4x256xf32>
    %383 = vector.broadcast %381 : vector<1x256xf32> to vector<4x256xf32>
    %384 = arith.mulf %383, %382 : vector<4x256xf32>
    %385 = arith.addf %380, %384 : vector<4x256xf32>
    %c0_10 = arith.constant 0 : index
    %c4 = arith.constant 4 : index
    %c0_11 = arith.constant 0 : index
    %386 = vector.load %arg4[%c0_10, %c4, %c0_11] : memref<1x20x256xf32, #tpu.memory_space<vmem>>, vector<1x4x256xf32>
    %387 = vector.shape_cast %386 : vector<1x4x256xf32> to vector<4x256xf32>
    %388 = vector.shape_cast %385 : vector<4x256xf32> to vector<1x4x256xf32>
    tpu.vector_store %arg4[%c0_10, %c4, %c0_11], %388 {strides = array<i32>} : memref<1x20x256xf32, #tpu.memory_space<vmem>>, vector<1x4x256xf32>,
    %389 = vector.extract_strided_slice %294 {offsets = [0, 0], sizes = [1, 256], strides = [1, 1]} : vector<5x256xf32> to vector<1x256xf32>
    %390 = vector.extract_strided_slice %334 {offsets = [0, 0], sizes = [4, 256], strides = [1, 1]} : vector<20x256xf32> to vector<4x256xf32>
    %391 = vector.broadcast %389 : vector<1x256xf32> to vector<4x256xf32>
    %392 = arith.mulf %391, %390 : vector<4x256xf32>
    %393 = vector.extract_strided_slice %294 {offsets = [1, 0], sizes = [1, 256], strides = [1, 1]} : vector<5x256xf32> to vector<1x256xf32>
    %394 = vector.extract_strided_slice %334 {offsets = [4, 0], sizes = [4, 256], strides = [1, 1]} : vector<20x256xf32> to vector<4x256xf32>
    %395 = vector.broadcast %393 : vector<1x256xf32> to vector<4x256xf32>
    %396 = arith.mulf %395, %394 : vector<4x256xf32>
    %397 = arith.addf %392, %396 : vector<4x256xf32>
    %398 = vector.extract_strided_slice %294 {offsets = [2, 0], sizes = [1, 256], strides = [1, 1]} : vector<5x256xf32> to vector<1x256xf32>
    %399 = vector.extract_strided_slice %334 {offsets = [8, 0], sizes = [4, 256], strides = [1, 1]} : vector<20x256xf32> to vector<4x256xf32>
    %400 = vector.broadcast %398 : vector<1x256xf32> to vector<4x256xf32>
    %401 = arith.mulf %400, %399 : vector<4x256xf32>
    %402 = arith.addf %397, %401 : vector<4x256xf32>
    %403 = vector.extract_strided_slice %294 {offsets = [3, 0], sizes = [1, 256], strides = [1, 1]} : vector<5x256xf32> to vector<1x256xf32>
    %404 = vector.extract_strided_slice %334 {offsets = [12, 0], sizes = [4, 256], strides = [1, 1]} : vector<20x256xf32> to vector<4x256xf32>
    %405 = vector.broadcast %403 : vector<1x256xf32> to vector<4x256xf32>
    %406 = arith.mulf %405, %404 : vector<4x256xf32>
    %407 = arith.addf %402, %406 : vector<4x256xf32>
    %408 = vector.extract_strided_slice %294 {offsets = [4, 0], sizes = [1, 256], strides = [1, 1]} : vector<5x256xf32> to vector<1x256xf32>
    %409 = vector.extract_strided_slice %334 {offsets = [16, 0], sizes = [4, 256], strides = [1, 1]} : vector<20x256xf32> to vector<4x256xf32>
    %410 = vector.broadcast %408 : vector<1x256xf32> to vector<4x256xf32>
    %411 = arith.mulf %410, %409 : vector<4x256xf32>
    %412 = arith.addf %407, %411 : vector<4x256xf32>
    %c0_12 = arith.constant 0 : index
    %c8 = arith.constant 8 : index
    %c0_13 = arith.constant 0 : index
    %413 = vector.load %arg4[%c0_12, %c8, %c0_13] : memref<1x20x256xf32, #tpu.memory_space<vmem>>, vector<1x4x256xf32>
    %414 = vector.shape_cast %413 : vector<1x4x256xf32> to vector<4x256xf32>
    %415 = vector.shape_cast %412 : vector<4x256xf32> to vector<1x4x256xf32>
    tpu.vector_store %arg4[%c0_12, %c8, %c0_13], %415 {strides = array<i32>} : memref<1x20x256xf32, #tpu.memory_space<vmem>>, vector<1x4x256xf32>,
    %416 = vector.extract_strided_slice %313 {offsets = [0, 0], sizes = [1, 256], strides = [1, 1]} : vector<5x256xf32> to vector<1x256xf32>
    %417 = vector.extract_strided_slice %334 {offsets = [0, 0], sizes = [4, 256], strides = [1, 1]} : vector<20x256xf32> to vector<4x256xf32>
    %418 = vector.broadcast %416 : vector<1x256xf32> to vector<4x256xf32>
    %419 = arith.mulf %418, %417 : vector<4x256xf32>
    %420 = vector.extract_strided_slice %313 {offsets = [1, 0], sizes = [1, 256], strides = [1, 1]} : vector<5x256xf32> to vector<1x256xf32>
    %421 = vector.extract_strided_slice %334 {offsets = [4, 0], sizes = [4, 256], strides = [1, 1]} : vector<20x256xf32> to vector<4x256xf32>
    %422 = vector.broadcast %420 : vector<1x256xf32> to vector<4x256xf32>
    %423 = arith.mulf %422, %421 : vector<4x256xf32>
    %424 = arith.addf %419, %423 : vector<4x256xf32>
    %425 = vector.extract_strided_slice %313 {offsets = [2, 0], sizes = [1, 256], strides = [1, 1]} : vector<5x256xf32> to vector<1x256xf32>
    %426 = vector.extract_strided_slice %334 {offsets = [8, 0], sizes = [4, 256], strides = [1, 1]} : vector<20x256xf32> to vector<4x256xf32>
    %427 = vector.broadcast %425 : vector<1x256xf32> to vector<4x256xf32>
    %428 = arith.mulf %427, %426 : vector<4x256xf32>
    %429 = arith.addf %424, %428 : vector<4x256xf32>
    %430 = vector.extract_strided_slice %313 {offsets = [3, 0], sizes = [1, 256], strides = [1, 1]} : vector<5x256xf32> to vector<1x256xf32>
    %431 = vector.extract_strided_slice %334 {offsets = [12, 0], sizes = [4, 256], strides = [1, 1]} : vector<20x256xf32> to vector<4x256xf32>
    %432 = vector.broadcast %430 : vector<1x256xf32> to vector<4x256xf32>
    %433 = arith.mulf %432, %431 : vector<4x256xf32>
    %434 = arith.addf %429, %433 : vector<4x256xf32>
    %435 = vector.extract_strided_slice %313 {offsets = [4, 0], sizes = [1, 256], strides = [1, 1]} : vector<5x256xf32> to vector<1x256xf32>
    %436 = vector.extract_strided_slice %334 {offsets = [16, 0], sizes = [4, 256], strides = [1, 1]} : vector<20x256xf32> to vector<4x256xf32>
    %437 = vector.broadcast %435 : vector<1x256xf32> to vector<4x256xf32>
    %438 = arith.mulf %437, %436 : vector<4x256xf32>
    %439 = arith.addf %434, %438 : vector<4x256xf32>
    %c0_14 = arith.constant 0 : index
    %c12 = arith.constant 12 : index
    %c0_15 = arith.constant 0 : index
    %440 = vector.load %arg4[%c0_14, %c12, %c0_15] : memref<1x20x256xf32, #tpu.memory_space<vmem>>, vector<1x4x256xf32>
    %441 = vector.shape_cast %440 : vector<1x4x256xf32> to vector<4x256xf32>
    %442 = vector.shape_cast %439 : vector<4x256xf32> to vector<1x4x256xf32>
    tpu.vector_store %arg4[%c0_14, %c12, %c0_15], %442 {strides = array<i32>} : memref<1x20x256xf32, #tpu.memory_space<vmem>>, vector<1x4x256xf32>,
    %443 = vector.extract_strided_slice %332 {offsets = [0, 0], sizes = [1, 256], strides = [1, 1]} : vector<5x256xf32> to vector<1x256xf32>
    %444 = vector.extract_strided_slice %334 {offsets = [0, 0], sizes = [4, 256], strides = [1, 1]} : vector<20x256xf32> to vector<4x256xf32>
    %445 = vector.broadcast %443 : vector<1x256xf32> to vector<4x256xf32>
    %446 = arith.mulf %445, %444 : vector<4x256xf32>
    %447 = vector.extract_strided_slice %332 {offsets = [1, 0], sizes = [1, 256], strides = [1, 1]} : vector<5x256xf32> to vector<1x256xf32>
    %448 = vector.extract_strided_slice %334 {offsets = [4, 0], sizes = [4, 256], strides = [1, 1]} : vector<20x256xf32> to vector<4x256xf32>
    %449 = vector.broadcast %447 : vector<1x256xf32> to vector<4x256xf32>
    %450 = arith.mulf %449, %448 : vector<4x256xf32>
    %451 = arith.addf %446, %450 : vector<4x256xf32>
    %452 = vector.extract_strided_slice %332 {offsets = [2, 0], sizes = [1, 256], strides = [1, 1]} : vector<5x256xf32> to vector<1x256xf32>
    %453 = vector.extract_strided_slice %334 {offsets = [8, 0], sizes = [4, 256], strides = [1, 1]} : vector<20x256xf32> to vector<4x256xf32>
    %454 = vector.broadcast %452 : vector<1x256xf32> to vector<4x256xf32>
    %455 = arith.mulf %454, %453 : vector<4x256xf32>
    %456 = arith.addf %451, %455 : vector<4x256xf32>
    %457 = vector.extract_strided_slice %332 {offsets = [3, 0], sizes = [1, 256], strides = [1, 1]} : vector<5x256xf32> to vector<1x256xf32>
    %458 = vector.extract_strided_slice %334 {offsets = [12, 0], sizes = [4, 256], strides = [1, 1]} : vector<20x256xf32> to vector<4x256xf32>
    %459 = vector.broadcast %457 : vector<1x256xf32> to vector<4x256xf32>
    %460 = arith.mulf %459, %458 : vector<4x256xf32>
    %461 = arith.addf %456, %460 : vector<4x256xf32>
    %462 = vector.extract_strided_slice %332 {offsets = [4, 0], sizes = [1, 256], strides = [1, 1]} : vector<5x256xf32> to vector<1x256xf32>
    %463 = vector.extract_strided_slice %334 {offsets = [16, 0], sizes = [4, 256], strides = [1, 1]} : vector<20x256xf32> to vector<4x256xf32>
    %464 = vector.broadcast %462 : vector<1x256xf32> to vector<4x256xf32>
    %465 = arith.mulf %464, %463 : vector<4x256xf32>
    %466 = arith.addf %461, %465 : vector<4x256xf32>
    %c0_16 = arith.constant 0 : index
    %c16 = arith.constant 16 : index
    %c0_17 = arith.constant 0 : index
    %467 = vector.load %arg4[%c0_16, %c16, %c0_17] : memref<1x20x256xf32, #tpu.memory_space<vmem>>, vector<1x4x256xf32>
    %468 = vector.shape_cast %467 : vector<1x4x256xf32> to vector<4x256xf32>
    %469 = vector.shape_cast %466 : vector<4x256xf32> to vector<1x4x256xf32>
    tpu.vector_store %arg4[%c0_16, %c16, %c0_17], %469 {strides = array<i32>} : memref<1x20x256xf32, #tpu.memory_space<vmem>>, vector<1x4x256xf32>,
    return
  }
  func.func @transform_0(%arg0: i32, %arg1: i32) -> (i32, i32, i32, i32) {
    %c0_i32 = arith.constant 0 : i32
    %c0_i32_0 = arith.constant 0 : i32
    %c0_i32_1 = arith.constant 0 : i32
    return %arg0, %c0_i32, %c0_i32_0, %arg1 : i32, i32, i32, i32
  }
  func.func @transform_1(%arg0: i32, %arg1: i32) -> (i32, i32, i32) {
    %c0_i32 = arith.constant 0 : i32
    %c0_i32_0 = arith.constant 0 : i32
    return %arg0, %c0_i32, %arg1 : i32, i32, i32
  }
  func.func @transform_2(%arg0: i32, %arg1: i32) -> (i32, i32, i32) {
    %c0_i32 = arith.constant 0 : i32
    %c0_i32_0 = arith.constant 0 : i32
    return %arg0, %c0_i32, %arg1 : i32, i32, i32
  }
}

</mosaic_0001>

<llo_original>
// kernel: tpu_custom_call.1
$region0: #{tpu_custom_call.1}
  #allocation0 [shape = 'u32[]', space=smem, size = 0x4, offset = 0x4, fixed_abs, tag = 'smem constant byte address 0x4 - core index']
  #allocation1 [shape = 'u32[144,128]{1,0:T(1,128)}', space=vmem, size = 0x12000, scoped, tag = 'internal scratch']
  %s0 = inlined_call_operand.vmem [shape: f32[2,5,5,256], index: 0, kind: input, shape index: {}]
  %s1 = inlined_call_operand.vmem [shape: f32[2,20,256], index: 1, kind: input, shape index: {}, may-alias: {1,2}]
  %s2 = inlined_call_operand.vmem [shape: f32[2,20,256], index: 2, kind: output, shape index: {}, may-alias: {1,2}]
  %s3 = sld [smem:[#allocation0]]
  $region41: #{tpu_custom_call.1} parent=0
    _
  %s5 = ssub.s32 1, %s3
  %s6 = scalar_select 0, %s5, %s3
  loop: start=0, step=1, limit=4
  $region2: #{tpu_custom_call.1} parent=0 // loop_pre_header
    _
  $region3: #{tpu_custom_call.1} parent=0 // loop_header
    %s8 = sphi 0, %s12
    %p9 = scmp.ge.s32.totalorder %s8, 4
    %s15 = sphi 0, %s27
    %s16 = sphi 0, %s23
    %s17 = sphi 0, %s15
    %s18 = sphi 0, %s16
    %s19 = sphi 0, %s17
    %s20 = sphi 0, %s18
    %s32 = sphi 0, %s34
    %s35 = sphi 0, %s32
    %s36 = sphi 0, %s35
    %s52 = sphi 0, %s36
    %s60 = sphi 0, %s62
    %s63 = sphi 0, %s60
    %s64 = sphi 0, %s63
    %s80 = sphi 0, %s64
    %s88 = sphi 0, %s90
    %s91 = sphi 0, %s88
    %s92 = sphi 0, %s91
    %s108 = sphi 0, %s92
  $region4: #{tpu_custom_call.1} parent=0 // loop_header_branch
    %11 = sbr.rel (%p9) target = $region8
  $region5: #{tpu_custom_call.1} parent=0 // loop_body
    %s13 = ssub.s32 %s8, 1
    %s14 = ssub.s32 %s8, 2
    %s21 = sadd.s32 1, %s16
    %p22 = scmp.ge.s32.totalorder %s21, 1
    %s23 = scalar_select %p22, 0, %s21
    %s24 = sadd.s32 1, %s15
    %s25 = scalar_select %p22, %s24, %s15
    %p26 = scmp.ge.s32.totalorder %s25, 2
    %s27 = scalar_select %p26, 0, %s25
    %s28 = ssub.s32 %s15, %s27
    %s29 = ssub.s32 %s16, %s23
    %s30 = sor.u32 %s28, %s29
    %p31 = scmp.eq.s32.totalorder %s30, 0
    %s33 = sadd.s32 %s32, 1
    %s34 = scalar_select %p31, %s32, %s33
    %p37 = pneg %p31
    %p38 = scmp.eq.s32.totalorder %s8, 1
    %p39 = por %p37, %p38
    %p40 = scmp.ne.s32.totalorder %s32, %s35
    %p41 = scmp.eq.s32.totalorder %s8, 0
    %p42 = por %p40, %p41
    %p43 = scmp.ne.s32.totalorder %s32, %s35
    %p44 = scmp.eq.s32.totalorder %s13, 1
    %p45 = por %p43, %p44
    %p46 = scmp.ne.s32.totalorder %s35, %s36
    %p47 = scmp.eq.s32.totalorder %s13, 0
    %p48 = por %p46, %p47
    %p49 = scmp.ne.s32.totalorder %s35, %s36
    %p50 = scmp.eq.s32.totalorder %s14, 1
    %p51 = por %p49, %p50
    %p53 = scmp.ne.s32.totalorder %s36, %s52
    %p54 = scmp.eq.s32.totalorder %s14, 0
    %p55 = por %p53, %p54
    %s56 = ssub.s32 %s15, %s27
    %s57 = ssub.s32 %s16, %s23
    %s58 = sor.u32 %s56, %s57
    %p59 = scmp.eq.s32.totalorder %s58, 0
    %s61 = sadd.s32 %s60, 1
    %s62 = scalar_select %p59, %s60, %s61
    %p65 = pneg %p59
    %p66 = scmp.eq.s32.totalorder %s8, 1
    %p67 = por %p65, %p66
    %p68 = scmp.ne.s32.totalorder %s60, %s63
    %p69 = scmp.eq.s32.totalorder %s8, 0
    %p70 = por %p68, %p69
    %p71 = scmp.ne.s32.totalorder %s60, %s63
    %p72 = scmp.eq.s32.totalorder %s13, 1
    %p73 = por %p71, %p72
    %p74 = scmp.ne.s32.totalorder %s63, %s64
    %p75 = scmp.eq.s32.totalorder %s13, 0
    %p76 = por %p74, %p75
    %p77 = scmp.ne.s32.totalorder %s63, %s64
    %p78 = scmp.eq.s32.totalorder %s14, 1
    %p79 = por %p77, %p78
    %p81 = scmp.ne.s32.totalorder %s64, %s80
    %p82 = scmp.eq.s32.totalorder %s14, 0
    %p83 = por %p81, %p82
    %s84 = ssub.s32 %s15, %s27
    %s85 = ssub.s32 %s16, %s23
    %s86 = sor.u32 %s84, %s85
    %p87 = scmp.eq.s32.totalorder %s86, 0
    %s89 = sadd.s32 %s88, 1
    %s90 = scalar_select %p87, %s88, %s89
    %p93 = pneg %p87
    %p94 = scmp.eq.s32.totalorder %s8, 1
    %p95 = por %p93, %p94
    %p96 = scmp.ne.s32.totalorder %s88, %s91
    %p97 = scmp.eq.s32.totalorder %s8, 0
    %p98 = por %p96, %p97
    %p99 = scmp.ne.s32.totalorder %s88, %s91
    %p100 = scmp.eq.s32.totalorder %s13, 1
    %p101 = por %p99, %p100
    %p102 = scmp.ne.s32.totalorder %s91, %s92
    %p103 = scmp.eq.s32.totalorder %s13, 0
    %p104 = por %p102, %p103
    %p105 = scmp.ne.s32.totalorder %s91, %s92
    %p106 = scmp.eq.s32.totalorder %s14, 1
    %p107 = por %p105, %p106
    %p109 = scmp.ne.s32.totalorder %s92, %s108
    %p110 = scmp.eq.s32.totalorder %s14, 0
    %p111 = por %p109, %p110
    %p112 = scmp.le.s32.totalorder 1, %s8
    %p113 = scmp.lt.s32.totalorder %s8, 3
    %p114 = pnand %p112, %p113
    %p115 = pneg %p114
    // Predicated region
    $region9: #{tpu_custom_call.1} parent=5 // pred_check
      _
    $region10: #{tpu_custom_call.1} parent=5 // pred_check_branch
      %117 = sbr.rel (%p114) target = $region12
    $region11: #{tpu_custom_call.1} parent=5 // pred_region
      %s118 = ssub.s32 %s8, 1
    $region12: #{tpu_custom_call.1} parent=5 // pred_fallthru
      _
    %p119 = scmp.lt.s32.totalorder %s8, 2
    // Predicated region
    $region13: #{tpu_custom_call.1} parent=5 // pred_check
      %p120 = pneg %p119
    $region14: #{tpu_custom_call.1} parent=5 // pred_check_branch
      %122 = sbr.rel (%p120) target = $region16
    $region15: #{tpu_custom_call.1} parent=5 // pred_region
      // Predicated region
      $region17: #{tpu_custom_call.1} parent=15 // pred_check
        %p123 = pneg %p42
      $region18: #{tpu_custom_call.1} parent=15 // pred_check_branch
        %125 = sbr.rel (%p123) target = $region20
      $region19: #{tpu_custom_call.1} parent=15 // pred_region
        %s126 = smul.u32 2, %s16
        %p127 = scmp.lt.s32.totalorder %s15, 1
        %s128 = scalar_select %p127, %s15, 1
        %p129 = scmp.lt.s32.totalorder %s126, 1
        %s130 = scalar_select %p129, %s126, 1
        %s131 = smul.addr %s128, 10
        %s132 = sadd.s32 %s130, %s131
        %s133 = smul.addr %s132, 8
        %s134 = scalar_lea.vmem %s0, %s133
        %s135 = smul.u32 2, %s16
      $region20: #{tpu_custom_call.1} parent=15 // pred_fallthru
        _
      // Predicated region
      $region21: #{tpu_custom_call.1} parent=15 // pred_check
        %p136 = pneg %p70
      $region22: #{tpu_custom_call.1} parent=15 // pred_check_branch
        %138 = sbr.rel (%p136) target = $region24
      $region23: #{tpu_custom_call.1} parent=15 // pred_region
        %s139 = smul.u32 2, %s16
        %p140 = scmp.lt.s32.totalorder %s15, 1
        %s141 = scalar_select %p140, %s15, 1
        %p142 = scmp.lt.s32.totalorder %s139, 1
        %s143 = scalar_select %p142, %s139, 1
        %s144 = smul.addr %s141, 6
        %s145 = sadd.s32 %s143, %s144
        %s146 = smul.addr %s145, 8
        %s147 = scalar_lea.vmem %s1, %s146
        %s148 = smul.u32 2, %s16
      $region24: #{tpu_custom_call.1} parent=15 // pred_fallthru
        _
    $region16: #{tpu_custom_call.1} parent=5 // pred_fallthru
      _
    %p149 = scmp.le.s32.totalorder 1, %s8
    %p150 = scmp.lt.s32.totalorder %s8, 3
    %p151 = pnand %p149, %p150
    %p152 = pneg %p151
    // Predicated region
    $region25: #{tpu_custom_call.1} parent=5 // pred_check
      _
    $region26: #{tpu_custom_call.1} parent=5 // pred_check_branch
      %154 = sbr.rel (%p151) target = $region28
    $region27: #{tpu_custom_call.1} parent=5 // pred_region
      %s155 = ssub.s32 %s8, 1
      %s156 = smul.u32 2, %s18
      %p157 = scmp.lt.s32.totalorder %s17, 1
      %s158 = scalar_select %p157, %s17, 1
      %p159 = scmp.lt.s32.totalorder %s156, 1
      %s160 = scalar_select %p159, %s156, 1
      %s161 = smul.addr %s158, 10
      %s162 = sadd.s32 %s160, %s161
      %s163 = smul.addr %s162, 8
      %s164 = scalar_lea.vmem %s0, %s163
      %p165 = pneg %p48
      %p166 = pneg %p45
      %s167 = smul.u32 2, %s18
      %p168 = scmp.lt.s32.totalorder %s17, 1
      %s169 = scalar_select %p168, %s17, 1
      %p170 = scmp.lt.s32.totalorder %s167, 1
      %s171 = scalar_select %p170, %s167, 1
      %s172 = smul.addr %s169, 6
      %s173 = sadd.s32 %s171, %s172
      %s174 = smul.addr %s173, 8
      %s175 = scalar_lea.vmem %s1, %s174
      %p176 = pneg %p76
      %p177 = pneg %p73
      %p178 = pneg %p104
      %p179 = pneg %p101
      %s180 = smul.u32 2, %s18
      %p181 = scmp.lt.s32.totalorder %s17, 1
      %s182 = scalar_select %p181, %s17, 1
      %p183 = scmp.lt.s32.totalorder %s180, 1
      %s184 = scalar_select %p183, %s180, 1
      %s185 = smul.addr %s182, 6
      %s186 = sadd.s32 %s184, %s185
      %s187 = smul.addr %s186, 8
      %s188 = scalar_lea.vmem %s2, %s187
      %s189 = smul.u32 2, %s18
      %p190 = scmp.lt.s32.totalorder %s17, 1
      %s191 = scalar_select %p190, %s17, 1
      %p192 = scmp.lt.s32.totalorder %s189, 1
      %s193 = scalar_select %p192, %s189, 1
      %s194 = smul.addr %s191, 10
      %s195 = sadd.s32 %s193, %s194
      %s196 = smul.addr %s195, 8
      %s197 = scalar_lea.vmem %s0, %s196
      %s198 = smul.u32 2, %s18
      %s199 = smul.u32 2, %s18
      %p200 = scmp.lt.s32.totalorder %s17, 1
      %s201 = scalar_select %p200, %s17, 1
      %p202 = scmp.lt.s32.totalorder %s199, 1
      %s203 = scalar_select %p202, %s199, 1
      %s204 = smul.addr %s201, 6
      %s205 = sadd.s32 %s203, %s204
      %s206 = smul.addr %s205, 8
      %s207 = scalar_lea.vmem %s1, %s206
      %s208 = smul.u32 2, %s18
      %s209 = smul.u32 2, %s18
      %p210 = scmp.lt.s32.totalorder %s17, 1
      %s211 = scalar_select %p210, %s17, 1
      %p212 = scmp.lt.s32.totalorder %s209, 1
      %s213 = scalar_select %p212, %s209, 1
      %s214 = smul.addr %s211, 6
      %s215 = sadd.s32 %s213, %s214
      %s216 = smul.addr %s215, 8
      %s217 = scalar_lea.vmem %s2, %s216
      %s218 = smul.u32 2, %s18
      %v219 = vld [vmem:[%s197] sm:$0x1f]
      %v220 = vld [vmem:[%s197 + $0x8] sm:$0x1f]
      %v221 = vld [vmem:[%s197 + $0x10] sm:$0x1f]
      %v222 = vld [vmem:[%s197 + $0x18] sm:$0x1f]
      %v223 = vld [vmem:[%s197 + $0x20] sm:$0x1f]
      %v224 = vld [vmem:[%s197 + $0x28] sm:$0x1f]
      %v225 = vld [vmem:[%s197 + $0x30] sm:$0x1f]
      %v226 = vld [vmem:[%s197 + $0x38] sm:$0x1f]
      %v227 = vld [vmem:[%s197 + $0x40] sm:$0x1f]
      %v228 = vld [vmem:[%s197 + $0x48] sm:$0x1f]
      %vm229 = vcmask 1044480
      %v230 = vsel %vm229, %v219, -inf
      %v231 = vrot.slane %v230, 4
      %v232 = vmax.f32 %v230, %v231
      %v233 = vrot.slane %v232, 2
      %v234 = vmax.f32 %v232, %v233
      %v235 = vrot.slane %v234, 1
      %v236 = vmax.f32 %v234, %v235
      %v237 = vsel %vm229, %v220, -inf
      %v238 = vrot.slane %v237, 4
      %v239 = vmax.f32 %v237, %v238
      %v240 = vrot.slane %v239, 2
      %v241 = vmax.f32 %v239, %v240
      %v242 = vrot.slane %v241, 1
      %v243 = vmax.f32 %v241, %v242
      %v244 = vsel %vm229, %v221, -inf
      %v245 = vrot.slane %v244, 4
      %v246 = vmax.f32 %v244, %v245
      %v247 = vrot.slane %v246, 2
      %v248 = vmax.f32 %v246, %v247
      %v249 = vrot.slane %v248, 1
      %v250 = vmax.f32 %v248, %v249
      %v251 = vsel %vm229, %v222, -inf
      %v252 = vrot.slane %v251, 4
      %v253 = vmax.f32 %v251, %v252
      %v254 = vrot.slane %v253, 2
      %v255 = vmax.f32 %v253, %v254
      %v256 = vrot.slane %v255, 1
      %v257 = vmax.f32 %v255, %v256
      %v258 = vsel %vm229, %v223, -inf
      %v259 = vrot.slane %v258, 4
      %v260 = vmax.f32 %v258, %v259
      %v261 = vrot.slane %v260, 2
      %v262 = vmax.f32 %v260, %v261
      %v263 = vrot.slane %v262, 1
      %v264 = vmax.f32 %v262, %v263
      %v265 = vsel %vm229, %v224, -inf
      %v266 = vrot.slane %v265, 4
      %v267 = vmax.f32 %v265, %v266
      %v268 = vrot.slane %v267, 2
      %v269 = vmax.f32 %v267, %v268
      %v270 = vrot.slane %v269, 1
      %v271 = vmax.f32 %v269, %v270
      %v272 = vsel %vm229, %v225, -inf
      %v273 = vrot.slane %v272, 4
      %v274 = vmax.f32 %v272, %v273
      %v275 = vrot.slane %v274, 2
      %v276 = vmax.f32 %v274, %v275
      %v277 = vrot.slane %v276, 1
      %v278 = vmax.f32 %v276, %v277
      %v279 = vsel %vm229, %v226, -inf
      %v280 = vrot.slane %v279, 4
      %v281 = vmax.f32 %v279, %v280
      %v282 = vrot.slane %v281, 2
      %v283 = vmax.f32 %v281, %v282
      %v284 = vrot.slane %v283, 1
      %v285 = vmax.f32 %v283, %v284
      %v286 = vsel %vm229, %v227, -inf
      %v287 = vrot.slane %v286, 4
      %v288 = vmax.f32 %v286, %v287
      %v289 = vrot.slane %v288, 2
      %v290 = vmax.f32 %v288, %v289
      %v291 = vrot.slane %v290, 1
      %v292 = vmax.f32 %v290, %v291
      %v293 = vsel %vm229, %v228, -inf
      %v294 = vrot.slane %v293, 4
      %v295 = vmax.f32 %v293, %v294
      %v296 = vrot.slane %v295, 2
      %v297 = vmax.f32 %v295, %v296
      %v298 = vrot.slane %v297, 1
      %v299 = vmax.f32 %v297, %v298
      %v300 = vsub.f32 %v219, %v236
      %v301 = vsub.f32 %v220, %v243
      %v302 = vsub.f32 %v221, %v250
      %v303 = vsub.f32 %v222, %v257
      %v304 = vsub.f32 %v223, %v264
      %v305 = vsub.f32 %v224, %v271
      %v306 = vsub.f32 %v225, %v278
      %v307 = vsub.f32 %v226, %v285
      %v308 = vsub.f32 %v227, %v292
      %v309 = vsub.f32 %v228, %v299
      %v310 = vmul.f32 %v300, 1.442695
      %v311 = vpow.pop %v310
      %v312 = vmul.f32 %v301, 1.442695
      %v313 = vpow.pop %v312
      %v314 = vmul.f32 %v302, 1.442695
      %v315 = vpow.pop %v314
      %v316 = vmul.f32 %v303, 1.442695
      %v317 = vpow.pop %v316
      %v318 = vmul.f32 %v304, 1.442695
      %v319 = vpow.pop %v318
      %v320 = vmul.f32 %v305, 1.442695
      %v321 = vpow.pop %v320
      %v322 = vmul.f32 %v306, 1.442695
      %v323 = vpow.pop %v322
      %v324 = vmul.f32 %v307, 1.442695
      %v325 = vpow.pop %v324
      %v326 = vmul.f32 %v308, 1.442695
      %v327 = vpow.pop %v326
      %v328 = vmul.f32 %v309, 1.442695
      %v329 = vpow.pop %v328
      %v330 = vsel %vm229, %v311, 0.0
      %v331 = vrot.slane %v330, 4
      %v332 = vadd.f32 %v330, %v331
      %v333 = vrot.slane %v332, 2
      %v334 = vadd.f32 %v332, %v333
      %v335 = vrot.slane %v334, 1
      %v336 = vadd.f32 %v334, %v335
      %v337 = vsel %vm229, %v313, 0.0
      %v338 = vrot.slane %v337, 4
      %v339 = vadd.f32 %v337, %v338
      %v340 = vrot.slane %v339, 2
      %v341 = vadd.f32 %v339, %v340
      %v342 = vrot.slane %v341, 1
      %v343 = vadd.f32 %v341, %v342
      %v344 = vsel %vm229, %v315, 0.0
      %v345 = vrot.slane %v344, 4
      %v346 = vadd.f32 %v344, %v345
      %v347 = vrot.slane %v346, 2
      %v348 = vadd.f32 %v346, %v347
      %v349 = vrot.slane %v348, 1
      %v350 = vadd.f32 %v348, %v349
      %v351 = vsel %vm229, %v317, 0.0
      %v352 = vrot.slane %v351, 4
      %v353 = vadd.f32 %v351, %v352
      %v354 = vrot.slane %v353, 2
      %v355 = vadd.f32 %v353, %v354
      %v356 = vrot.slane %v355, 1
      %v357 = vadd.f32 %v355, %v356
      %v358 = vsel %vm229, %v319, 0.0
      %v359 = vrot.slane %v358, 4
      %v360 = vadd.f32 %v358, %v359
      %v361 = vrot.slane %v360, 2
      %v362 = vadd.f32 %v360, %v361
      %v363 = vrot.slane %v362, 1
      %v364 = vadd.f32 %v362, %v363
      %v365 = vsel %vm229, %v321, 0.0
      %v366 = vrot.slane %v365, 4
      %v367 = vadd.f32 %v365, %v366
      %v368 = vrot.slane %v367, 2
      %v369 = vadd.f32 %v367, %v368
      %v370 = vrot.slane %v369, 1
      %v371 = vadd.f32 %v369, %v370
      %v372 = vsel %vm229, %v323, 0.0
      %v373 = vrot.slane %v372, 4
      %v374 = vadd.f32 %v372, %v373
      %v375 = vrot.slane %v374, 2
      %v376 = vadd.f32 %v374, %v375
      %v377 = vrot.slane %v376, 1
      %v378 = vadd.f32 %v376, %v377
      %v379 = vsel %vm229, %v325, 0.0
      %v380 = vrot.slane %v379, 4
      %v381 = vadd.f32 %v379, %v380
      %v382 = vrot.slane %v381, 2
      %v383 = vadd.f32 %v381, %v382
      %v384 = vrot.slane %v383, 1
      %v385 = vadd.f32 %v383, %v384
      %v386 = vsel %vm229, %v327, 0.0
      %v387 = vrot.slane %v386, 4
      %v388 = vadd.f32 %v386, %v387
      %v389 = vrot.slane %v388, 2
      %v390 = vadd.f32 %v388, %v389
      %v391 = vrot.slane %v390, 1
      %v392 = vadd.f32 %v390, %v391
      %v393 = vsel %vm229, %v329, 0.0
      %v394 = vrot.slane %v393, 4
      %v395 = vadd.f32 %v393, %v394
      %v396 = vrot.slane %v395, 2
      %v397 = vadd.f32 %v395, %v396
      %v398 = vrot.slane %v397, 1
      %v399 = vadd.f32 %v397, %v398
      %v400 = vrcp.pop %v336
      %v401 = vrcp.pop %v343
      %v402 = vrcp.pop %v350
      %v403 = vrcp.pop %v357
      %v404 = vrcp.pop %v364
      %v405 = vrcp.pop %v371
      %v406 = vrcp.pop %v378
      %v407 = vrcp.pop %v385
      %v408 = vrcp.pop %v392
      %v409 = vrcp.pop %v399
      %v410 = vmul.f32 %v311, %v400
      %v411 = vmul.f32 %v313, %v401
      %v412 = vmul.f32 %v315, %v402
      %v413 = vmul.f32 %v317, %v403
      %v414 = vmul.f32 %v319, %v404
      %v415 = vmul.f32 %v321, %v405
      %v416 = vmul.f32 %v323, %v406
      %v417 = vmul.f32 %v325, %v407
      %v418 = vmul.f32 %v327, %v408
      %v419 = vmul.f32 %v329, %v409
      %v420 = vlaneseq
      %v421 = vshrl.u32 %v420, 7
      %vm422 = vcmp.eq.s32.totalorder %v421, 0
      %v423 = vsel %vm422, 1, 0
      %v424 = vcvt.s32.f32 %v423
      %v425 = vadd.f32 %v410, %v424
      %v426 = vadd.f32 %v411, %v424
      %vm427 = vcmp.eq.s32.totalorder %v421, 1
      %v428 = vsel %vm427, 1, 0
      %v429 = vcvt.s32.f32 %v428
      %v430 = vadd.f32 %v412, %v429
      %v431 = vadd.f32 %v413, %v429
      %vm432 = vcmp.eq.s32.totalorder %v421, 2
      %v433 = vsel %vm432, 1, 0
      %v434 = vcvt.s32.f32 %v433
      %v435 = vadd.f32 %v414, %v434
      %v436 = vadd.f32 %v415, %v434
      %vm437 = vcmp.eq.s32.totalorder %v421, 3
      %v438 = vsel %vm437, 1, 0
      %v439 = vcvt.s32.f32 %v438
      %v440 = vadd.f32 %v416, %v439
      %v441 = vadd.f32 %v417, %v439
      %vm442 = vcmp.eq.s32.totalorder %v421, 4
      %v443 = vsel %vm442, 1, 0
      %v444 = vcvt.s32.f32 %v443
      %v445 = vadd.f32 %v418, %v444
      %v446 = vadd.f32 %v419, %v444
      %v447 = vlaneseq
      %v448 = vshrl.u32 %v447, 7
      %v449 = vsub.s32 0, %v448
      %v450 = vrot.slane %v425, %v449
      %v451 = vlaneseq
      %v452 = vshrl.u32 %v451, 7
      %v453 = vsub.s32 0, %v452
      %v454 = vrot.slane %v426, %v453
      %v455 = vmul.f32 %v450, %v425
      %v456 = vmul.f32 %v454, %v426
      %v457 = vlaneseq
      %v458 = vshrl.u32 %v457, 7
      %v459 = vsub.s32 1, %v458
      %v460 = vrot.slane %v425, %v459
      %v461 = vlaneseq
      %v462 = vshrl.u32 %v461, 7
      %v463 = vsub.s32 1, %v462
      %v464 = vrot.slane %v426, %v463
      %v465 = vmul.f32 %v460, %v430
      %v466 = vmul.f32 %v464, %v431
      %v467 = vadd.f32 %v455, %v465
      %v468 = vadd.f32 %v456, %v466
      %v469 = vlaneseq
      %v470 = vshrl.u32 %v469, 7
      %v471 = vsub.s32 2, %v470
      %v472 = vrot.slane %v425, %v471
      %v473 = vlaneseq
      %v474 = vshrl.u32 %v473, 7
      %v475 = vsub.s32 2, %v474
      %v476 = vrot.slane %v426, %v475
      %v477 = vmul.f32 %v472, %v435
      %v478 = vmul.f32 %v476, %v436
      %v479 = vadd.f32 %v467, %v477
      %v480 = vadd.f32 %v468, %v478
      %v481 = vlaneseq
      %v482 = vshrl.u32 %v481, 7
      %v483 = vsub.s32 3, %v482
      %v484 = vrot.slane %v425, %v483
      %v485 = vlaneseq
      %v486 = vshrl.u32 %v485, 7
      %v487 = vsub.s32 3, %v486
      %v488 = vrot.slane %v426, %v487
      %v489 = vmul.f32 %v484, %v440
      %v490 = vmul.f32 %v488, %v441
      %v491 = vadd.f32 %v479, %v489
      %v492 = vadd.f32 %v480, %v490
      %v493 = vlaneseq
      %v494 = vshrl.u32 %v493, 7
      %v495 = vsub.s32 4, %v494
      %v496 = vrot.slane %v425, %v495
      %v497 = vlaneseq
      %v498 = vshrl.u32 %v497, 7
      %v499 = vsub.s32 4, %v498
      %v500 = vrot.slane %v426, %v499
      %v501 = vmul.f32 %v496, %v445
      %v502 = vmul.f32 %v500, %v446
      %v503 = vadd.f32 %v491, %v501
      %v504 = vadd.f32 %v492, %v502
      %v505 = vlaneseq
      %v506 = vshrl.u32 %v505, 7
      %v507 = vsub.s32 0, %v506
      %v508 = vrot.slane %v430, %v507
      %v509 = vlaneseq
      %v510 = vshrl.u32 %v509, 7
      %v511 = vsub.s32 0, %v510
      %v512 = vrot.slane %v431, %v511
      %v513 = vmul.f32 %v508, %v425
      %v514 = vmul.f32 %v512, %v426
      %v515 = vlaneseq
      %v516 = vshrl.u32 %v515, 7
      %v517 = vsub.s32 1, %v516
      %v518 = vrot.slane %v430, %v517
      %v519 = vlaneseq
      %v520 = vshrl.u32 %v519, 7
      %v521 = vsub.s32 1, %v520
      %v522 = vrot.slane %v431, %v521
      %v523 = vmul.f32 %v518, %v430
      %v524 = vmul.f32 %v522, %v431
      %v525 = vadd.f32 %v513, %v523
      %v526 = vadd.f32 %v514, %v524
      %v527 = vlaneseq
      %v528 = vshrl.u32 %v527, 7
      %v529 = vsub.s32 2, %v528
      %v530 = vrot.slane %v430, %v529
      %v531 = vlaneseq
      %v532 = vshrl.u32 %v531, 7
      %v533 = vsub.s32 2, %v532
      %v534 = vrot.slane %v431, %v533
      %v535 = vmul.f32 %v530, %v435
      %v536 = vmul.f32 %v534, %v436
      %v537 = vadd.f32 %v525, %v535
      %v538 = vadd.f32 %v526, %v536
      %v539 = vlaneseq
      %v540 = vshrl.u32 %v539, 7
      %v541 = vsub.s32 3, %v540
      %v542 = vrot.slane %v430, %v541
      %v543 = vlaneseq
      %v544 = vshrl.u32 %v543, 7
      %v545 = vsub.s32 3, %v544
      %v546 = vrot.slane %v431, %v545
      %v547 = vmul.f32 %v542, %v440
      %v548 = vmul.f32 %v546, %v441
      %v549 = vadd.f32 %v537, %v547
      %v550 = vadd.f32 %v538, %v548
      %v551 = vlaneseq
      %v552 = vshrl.u32 %v551, 7
      %v553 = vsub.s32 4, %v552
      %v554 = vrot.slane %v430, %v553
      %v555 = vlaneseq
      %v556 = vshrl.u32 %v555, 7
      %v557 = vsub.s32 4, %v556
      %v558 = vrot.slane %v431, %v557
      %v559 = vmul.f32 %v554, %v445
      %v560 = vmul.f32 %v558, %v446
      %v561 = vadd.f32 %v549, %v559
      %v562 = vadd.f32 %v550, %v560
      %v563 = vlaneseq
      %v564 = vshrl.u32 %v563, 7
      %v565 = vsub.s32 0, %v564
      %v566 = vrot.slane %v435, %v565
      %v567 = vlaneseq
      %v568 = vshrl.u32 %v567, 7
      %v569 = vsub.s32 0, %v568
      %v570 = vrot.slane %v436, %v569
      %v571 = vmul.f32 %v566, %v425
      %v572 = vmul.f32 %v570, %v426
      %v573 = vlaneseq
      %v574 = vshrl.u32 %v573, 7
      %v575 = vsub.s32 1, %v574
      %v576 = vrot.slane %v435, %v575
      %v577 = vlaneseq
      %v578 = vshrl.u32 %v577, 7
      %v579 = vsub.s32 1, %v578
      %v580 = vrot.slane %v436, %v579
      %v581 = vmul.f32 %v576, %v430
      %v582 = vmul.f32 %v580, %v431
      %v583 = vadd.f32 %v571, %v581
      %v584 = vadd.f32 %v572, %v582
      %v585 = vlaneseq
      %v586 = vshrl.u32 %v585, 7
      %v587 = vsub.s32 2, %v586
      %v588 = vrot.slane %v435, %v587
      %v589 = vlaneseq
      %v590 = vshrl.u32 %v589, 7
      %v591 = vsub.s32 2, %v590
      %v592 = vrot.slane %v436, %v591
      %v593 = vmul.f32 %v588, %v435
      %v594 = vmul.f32 %v592, %v436
      %v595 = vadd.f32 %v583, %v593
      %v596 = vadd.f32 %v584, %v594
      %v597 = vlaneseq
      %v598 = vshrl.u32 %v597, 7
      %v599 = vsub.s32 3, %v598
      %v600 = vrot.slane %v435, %v599
      %v601 = vlaneseq
      %v602 = vshrl.u32 %v601, 7
      %v603 = vsub.s32 3, %v602
      %v604 = vrot.slane %v436, %v603
      %v605 = vmul.f32 %v600, %v440
      %v606 = vmul.f32 %v604, %v441
      %v607 = vadd.f32 %v595, %v605
      %v608 = vadd.f32 %v596, %v606
      %v609 = vlaneseq
      %v610 = vshrl.u32 %v609, 7
      %v611 = vsub.s32 4, %v610
      %v612 = vrot.slane %v435, %v611
      %v613 = vlaneseq
      %v614 = vshrl.u32 %v613, 7
      %v615 = vsub.s32 4, %v614
      %v616 = vrot.slane %v436, %v615
      %v617 = vmul.f32 %v612, %v445
      %v618 = vmul.f32 %v616, %v446
      %v619 = vadd.f32 %v607, %v617
      %v620 = vadd.f32 %v608, %v618
      %v621 = vlaneseq
      %v622 = vshrl.u32 %v621, 7
      %v623 = vsub.s32 0, %v622
      %v624 = vrot.slane %v440, %v623
      %v625 = vlaneseq
      %v626 = vshrl.u32 %v625, 7
      %v627 = vsub.s32 0, %v626
      %v628 = vrot.slane %v441, %v627
      %v629 = vmul.f32 %v624, %v425
      %v630 = vmul.f32 %v628, %v426
      %v631 = vlaneseq
      %v632 = vshrl.u32 %v631, 7
      %v633 = vsub.s32 1, %v632
      %v634 = vrot.slane %v440, %v633
      %v635 = vlaneseq
      %v636 = vshrl.u32 %v635, 7
      %v637 = vsub.s32 1, %v636
      %v638 = vrot.slane %v441, %v637
      %v639 = vmul.f32 %v634, %v430
      %v640 = vmul.f32 %v638, %v431
      %v641 = vadd.f32 %v629, %v639
      %v642 = vadd.f32 %v630, %v640
      %v643 = vlaneseq
      %v644 = vshrl.u32 %v643, 7
      %v645 = vsub.s32 2, %v644
      %v646 = vrot.slane %v440, %v645
      %v647 = vlaneseq
      %v648 = vshrl.u32 %v647, 7
      %v649 = vsub.s32 2, %v648
      %v650 = vrot.slane %v441, %v649
      %v651 = vmul.f32 %v646, %v435
      %v652 = vmul.f32 %v650, %v436
      %v653 = vadd.f32 %v641, %v651
      %v654 = vadd.f32 %v642, %v652
      %v655 = vlaneseq
      %v656 = vshrl.u32 %v655, 7
      %v657 = vsub.s32 3, %v656
      %v658 = vrot.slane %v440, %v657
      %v659 = vlaneseq
      %v660 = vshrl.u32 %v659, 7
      %v661 = vsub.s32 3, %v660
      %v662 = vrot.slane %v441, %v661
      %v663 = vmul.f32 %v658, %v440
      %v664 = vmul.f32 %v662, %v441
      %v665 = vadd.f32 %v653, %v663
      %v666 = vadd.f32 %v654, %v664
      %v667 = vlaneseq
      %v668 = vshrl.u32 %v667, 7
      %v669 = vsub.s32 4, %v668
      %v670 = vrot.slane %v440, %v669
      %v671 = vlaneseq
      %v672 = vshrl.u32 %v671, 7
      %v673 = vsub.s32 4, %v672
      %v674 = vrot.slane %v441, %v673
      %v675 = vmul.f32 %v670, %v445
      %v676 = vmul.f32 %v674, %v446
      %v677 = vadd.f32 %v665, %v675
      %v678 = vadd.f32 %v666, %v676
      %v679 = vlaneseq
      %v680 = vshrl.u32 %v679, 7
      %v681 = vsub.s32 0, %v680
      %v682 = vrot.slane %v445, %v681
      %v683 = vlaneseq
      %v684 = vshrl.u32 %v683, 7
      %v685 = vsub.s32 0, %v684
      %v686 = vrot.slane %v446, %v685
      %v687 = vmul.f32 %v682, %v425
      %v688 = vmul.f32 %v686, %v426
      %v689 = vlaneseq
      %v690 = vshrl.u32 %v689, 7
      %v691 = vsub.s32 1, %v690
      %v692 = vrot.slane %v445, %v691
      %v693 = vlaneseq
      %v694 = vshrl.u32 %v693, 7
      %v695 = vsub.s32 1, %v694
      %v696 = vrot.slane %v446, %v695
      %v697 = vmul.f32 %v692, %v430
      %v698 = vmul.f32 %v696, %v431
      %v699 = vadd.f32 %v687, %v697
      %v700 = vadd.f32 %v688, %v698
      %v701 = vlaneseq
      %v702 = vshrl.u32 %v701, 7
      %v703 = vsub.s32 2, %v702
      %v704 = vrot.slane %v445, %v703
      %v705 = vlaneseq
      %v706 = vshrl.u32 %v705, 7
      %v707 = vsub.s32 2, %v706
      %v708 = vrot.slane %v446, %v707
      %v709 = vmul.f32 %v704, %v435
      %v710 = vmul.f32 %v708, %v436
      %v711 = vadd.f32 %v699, %v709
      %v712 = vadd.f32 %v700, %v710
      %v713 = vlaneseq
      %v714 = vshrl.u32 %v713, 7
      %v715 = vsub.s32 3, %v714
      %v716 = vrot.slane %v445, %v715
      %v717 = vlaneseq
      %v718 = vshrl.u32 %v717, 7
      %v719 = vsub.s32 3, %v718
      %v720 = vrot.slane %v446, %v719
      %v721 = vmul.f32 %v716, %v440
      %v722 = vmul.f32 %v720, %v441
      %v723 = vadd.f32 %v711, %v721
      %v724 = vadd.f32 %v712, %v722
      %v725 = vlaneseq
      %v726 = vshrl.u32 %v725, 7
      %v727 = vsub.s32 4, %v726
      %v728 = vrot.slane %v445, %v727
      %v729 = vlaneseq
      %v730 = vshrl.u32 %v729, 7
      %v731 = vsub.s32 4, %v730
      %v732 = vrot.slane %v446, %v731
      %v733 = vmul.f32 %v728, %v445
      %v734 = vmul.f32 %v732, %v446
      %v735 = vadd.f32 %v723, %v733
      %v736 = vadd.f32 %v724, %v734
      %v737 = vlaneseq
      %v738 = vshrl.u32 %v737, 7
      %v739 = vsub.s32 0, %v738
      %v740 = vrot.slane %v503, %v739
      %v741 = vlaneseq
      %v742 = vshrl.u32 %v741, 7
      %v743 = vsub.s32 0, %v742
      %v744 = vrot.slane %v504, %v743
      %v745 = vmul.f32 %v740, %v503
      %v746 = vmul.f32 %v744, %v504
      %v747 = vlaneseq
      %v748 = vshrl.u32 %v747, 7
      %v749 = vsub.s32 1, %v748
      %v750 = vrot.slane %v503, %v749
      %v751 = vlaneseq
      %v752 = vshrl.u32 %v751, 7
      %v753 = vsub.s32 1, %v752
      %v754 = vrot.slane %v504, %v753
      %v755 = vmul.f32 %v750, %v561
      %v756 = vmul.f32 %v754, %v562
      %v757 = vadd.f32 %v745, %v755
      %v758 = vadd.f32 %v746, %v756
      %v759 = vlaneseq
      %v760 = vshrl.u32 %v759, 7
      %v761 = vsub.s32 2, %v760
      %v762 = vrot.slane %v503, %v761
      %v763 = vlaneseq
      %v764 = vshrl.u32 %v763, 7
      %v765 = vsub.s32 2, %v764
      %v766 = vrot.slane %v504, %v765
      %v767 = vmul.f32 %v762, %v619
      %v768 = vmul.f32 %v766, %v620
      %v769 = vadd.f32 %v757, %v767
      %v770 = vadd.f32 %v758, %v768
      %v771 = vlaneseq
      %v772 = vshrl.u32 %v771, 7
      %v773 = vsub.s32 3, %v772
      %v774 = vrot.slane %v503, %v773
      %v775 = vlaneseq
      %v776 = vshrl.u32 %v775, 7
      %v777 = vsub.s32 3, %v776
      %v778 = vrot.slane %v504, %v777
      %v779 = vmul.f32 %v774, %v677
      %v780 = vmul.f32 %v778, %v678
      %v781 = vadd.f32 %v769, %v779
      %v782 = vadd.f32 %v770, %v780
      %v783 = vlaneseq
      %v784 = vshrl.u32 %v783, 7
      %v785 = vsub.s32 4, %v784
      %v786 = vrot.slane %v503, %v785
      %v787 = vlaneseq
      %v788 = vshrl.u32 %v787, 7
      %v789 = vsub.s32 4, %v788
      %v790 = vrot.slane %v504, %v789
      %v791 = vmul.f32 %v786, %v735
      %v792 = vmul.f32 %v790, %v736
      %v793 = vadd.f32 %v781, %v791
      %v794 = vadd.f32 %v782, %v792
      %v795 = vlaneseq
      %v796 = vshrl.u32 %v795, 7
      %v797 = vsub.s32 0, %v796
      %v798 = vrot.slane %v561, %v797
      %v799 = vlaneseq
      %v800 = vshrl.u32 %v799, 7
      %v801 = vsub.s32 0, %v800
      %v802 = vrot.slane %v562, %v801
      %v803 = vmul.f32 %v798, %v503
      %v804 = vmul.f32 %v802, %v504
      %v805 = vlaneseq
      %v806 = vshrl.u32 %v805, 7
      %v807 = vsub.s32 1, %v806
      %v808 = vrot.slane %v561, %v807
      %v809 = vlaneseq
      %v810 = vshrl.u32 %v809, 7
      %v811 = vsub.s32 1, %v810
      %v812 = vrot.slane %v562, %v811
      %v813 = vmul.f32 %v808, %v561
      %v814 = vmul.f32 %v812, %v562
      %v815 = vadd.f32 %v803, %v813
      %v816 = vadd.f32 %v804, %v814
      %v817 = vlaneseq
      %v818 = vshrl.u32 %v817, 7
      %v819 = vsub.s32 2, %v818
      %v820 = vrot.slane %v561, %v819
      %v821 = vlaneseq
      %v822 = vshrl.u32 %v821, 7
      %v823 = vsub.s32 2, %v822
      %v824 = vrot.slane %v562, %v823
      %v825 = vmul.f32 %v820, %v619
      %v826 = vmul.f32 %v824, %v620
      %v827 = vadd.f32 %v815, %v825
      %v828 = vadd.f32 %v816, %v826
      %v829 = vlaneseq
      %v830 = vshrl.u32 %v829, 7
      %v831 = vsub.s32 3, %v830
      %v832 = vrot.slane %v561, %v831
      %v833 = vlaneseq
      %v834 = vshrl.u32 %v833, 7
      %v835 = vsub.s32 3, %v834
      %v836 = vrot.slane %v562, %v835
      %v837 = vmul.f32 %v832, %v677
      %v838 = vmul.f32 %v836, %v678
      %v839 = vadd.f32 %v827, %v837
      %v840 = vadd.f32 %v828, %v838
      %v841 = vlaneseq
      %v842 = vshrl.u32 %v841, 7
      %v843 = vsub.s32 4, %v842
      %v844 = vrot.slane %v561, %v843
      %v845 = vlaneseq
      %v846 = vshrl.u32 %v845, 7
      %v847 = vsub.s32 4, %v846
      %v848 = vrot.slane %v562, %v847
      %v849 = vmul.f32 %v844, %v735
      %v850 = vmul.f32 %v848, %v736
      %v851 = vadd.f32 %v839, %v849
      %v852 = vadd.f32 %v840, %v850
      %v853 = vlaneseq
      %v854 = vshrl.u32 %v853, 7
      %v855 = vsub.s32 0, %v854
      %v856 = vrot.slane %v619, %v855
      %v857 = vlaneseq
      %v858 = vshrl.u32 %v857, 7
      %v859 = vsub.s32 0, %v858
      %v860 = vrot.slane %v620, %v859
      %v861 = vmul.f32 %v856, %v503
      %v862 = vmul.f32 %v860, %v504
      %v863 = vlaneseq
      %v864 = vshrl.u32 %v863, 7
      %v865 = vsub.s32 1, %v864
      %v866 = vrot.slane %v619, %v865
      %v867 = vlaneseq
      %v868 = vshrl.u32 %v867, 7
      %v869 = vsub.s32 1, %v868
      %v870 = vrot.slane %v620, %v869
      %v871 = vmul.f32 %v866, %v561
      %v872 = vmul.f32 %v870, %v562
      %v873 = vadd.f32 %v861, %v871
      %v874 = vadd.f32 %v862, %v872
      %v875 = vlaneseq
      %v876 = vshrl.u32 %v875, 7
      %v877 = vsub.s32 2, %v876
      %v878 = vrot.slane %v619, %v877
      %v879 = vlaneseq
      %v880 = vshrl.u32 %v879, 7
      %v881 = vsub.s32 2, %v880
      %v882 = vrot.slane %v620, %v881
      %v883 = vmul.f32 %v878, %v619
      %v884 = vmul.f32 %v882, %v620
      %v885 = vadd.f32 %v873, %v883
      %v886 = vadd.f32 %v874, %v884
      %v887 = vlaneseq
      %v888 = vshrl.u32 %v887, 7
      %v889 = vsub.s32 3, %v888
      %v890 = vrot.slane %v619, %v889
      %v891 = vlaneseq
      %v892 = vshrl.u32 %v891, 7
      %v893 = vsub.s32 3, %v892
      %v894 = vrot.slane %v620, %v893
      %v895 = vmul.f32 %v890, %v677
      %v896 = vmul.f32 %v894, %v678
      %v897 = vadd.f32 %v885, %v895
      %v898 = vadd.f32 %v886, %v896
      %v899 = vlaneseq
      %v900 = vshrl.u32 %v899, 7
      %v901 = vsub.s32 4, %v900
      %v902 = vrot.slane %v619, %v901
      %v903 = vlaneseq
      %v904 = vshrl.u32 %v903, 7
      %v905 = vsub.s32 4, %v904
      %v906 = vrot.slane %v620, %v905
      %v907 = vmul.f32 %v902, %v735
      %v908 = vmul.f32 %v906, %v736
      %v909 = vadd.f32 %v897, %v907
      %v910 = vadd.f32 %v898, %v908
      %v911 = vlaneseq
      %v912 = vshrl.u32 %v911, 7
      %v913 = vsub.s32 0, %v912
      %v914 = vrot.slane %v677, %v913
      %v915 = vlaneseq
      %v916 = vshrl.u32 %v915, 7
      %v917 = vsub.s32 0, %v916
      %v918 = vrot.slane %v678, %v917
      %v919 = vmul.f32 %v914, %v503
      %v920 = vmul.f32 %v918, %v504
      %v921 = vlaneseq
      %v922 = vshrl.u32 %v921, 7
      %v923 = vsub.s32 1, %v922
      %v924 = vrot.slane %v677, %v923
      %v925 = vlaneseq
      %v926 = vshrl.u32 %v925, 7
      %v927 = vsub.s32 1, %v926
      %v928 = vrot.slane %v678, %v927
      %v929 = vmul.f32 %v924, %v561
      %v930 = vmul.f32 %v928, %v562
      %v931 = vadd.f32 %v919, %v929
      %v932 = vadd.f32 %v920, %v930
      %v933 = vlaneseq
      %v934 = vshrl.u32 %v933, 7
      %v935 = vsub.s32 2, %v934
      %v936 = vrot.slane %v677, %v935
      %v937 = vlaneseq
      %v938 = vshrl.u32 %v937, 7
      %v939 = vsub.s32 2, %v938
      %v940 = vrot.slane %v678, %v939
      %v941 = vmul.f32 %v936, %v619
      %v942 = vmul.f32 %v940, %v620
      %v943 = vadd.f32 %v931, %v941
      %v944 = vadd.f32 %v932, %v942
      %v945 = vlaneseq
      %v946 = vshrl.u32 %v945, 7
      %v947 = vsub.s32 3, %v946
      %v948 = vrot.slane %v677, %v947
      %v949 = vlaneseq
      %v950 = vshrl.u32 %v949, 7
      %v951 = vsub.s32 3, %v950
      %v952 = vrot.slane %v678, %v951
      %v953 = vmul.f32 %v948, %v677
      %v954 = vmul.f32 %v952, %v678
      %v955 = vadd.f32 %v943, %v953
      %v956 = vadd.f32 %v944, %v954
      %v957 = vlaneseq
      %v958 = vshrl.u32 %v957, 7
      %v959 = vsub.s32 4, %v958
      %v960 = vrot.slane %v677, %v959
      %v961 = vlaneseq
      %v962 = vshrl.u32 %v961, 7
      %v963 = vsub.s32 4, %v962
      %v964 = vrot.slane %v678, %v963
      %v965 = vmul.f32 %v960, %v735
      %v966 = vmul.f32 %v964, %v736
      %v967 = vadd.f32 %v955, %v965
      %v968 = vadd.f32 %v956, %v966
      %v969 = vlaneseq
      %v970 = vshrl.u32 %v969, 7
      %v971 = vsub.s32 0, %v970
      %v972 = vrot.slane %v735, %v971
      %v973 = vlaneseq
      %v974 = vshrl.u32 %v973, 7
      %v975 = vsub.s32 0, %v974
      %v976 = vrot.slane %v736, %v975
      %v977 = vmul.f32 %v972, %v503
      %v978 = vmul.f32 %v976, %v504
      %v979 = vlaneseq
      %v980 = vshrl.u32 %v979, 7
      %v981 = vsub.s32 1, %v980
      %v982 = vrot.slane %v735, %v981
      %v983 = vlaneseq
      %v984 = vshrl.u32 %v983, 7
      %v985 = vsub.s32 1, %v984
      %v986 = vrot.slane %v736, %v985
      %v987 = vmul.f32 %v982, %v561
      %v988 = vmul.f32 %v986, %v562
      %v989 = vadd.f32 %v977, %v987
      %v990 = vadd.f32 %v978, %v988
      %v991 = vlaneseq
      %v992 = vshrl.u32 %v991, 7
      %v993 = vsub.s32 2, %v992
      %v994 = vrot.slane %v735, %v993
      %v995 = vlaneseq
      %v996 = vshrl.u32 %v995, 7
      %v997 = vsub.s32 2, %v996
      %v998 = vrot.slane %v736, %v997
      %v999 = vmul.f32 %v994, %v619
      %v1000 = vmul.f32 %v998, %v620
      %v1001 = vadd.f32 %v989, %v999
      %v1002 = vadd.f32 %v990, %v1000
      %v1003 = vlaneseq
      %v1004 = vshrl.u32 %v1003, 7
      %v1005 = vsub.s32 3, %v1004
      %v1006 = vrot.slane %v735, %v1005
      %v1007 = vlaneseq
      %v1008 = vshrl.u32 %v1007, 7
      %v1009 = vsub.s32 3, %v1008
      %v1010 = vrot.slane %v736, %v1009
      %v1011 = vmul.f32 %v1006, %v677
      %v1012 = vmul.f32 %v1010, %v678
      %v1013 = vadd.f32 %v1001, %v1011
      %v1014 = vadd.f32 %v1002, %v1012
      %v1015 = vlaneseq
      %v1016 = vshrl.u32 %v1015, 7
      %v1017 = vsub.s32 4, %v1016
      %v1018 = vrot.slane %v735, %v1017
      %v1019 = vlaneseq
      %v1020 = vshrl.u32 %v1019, 7
      %v1021 = vsub.s32 4, %v1020
      %v1022 = vrot.slane %v736, %v1021
      %v1023 = vmul.f32 %v1018, %v735
      %v1024 = vmul.f32 %v1022, %v736
      %v1025 = vadd.f32 %v1013, %v1023
      %v1026 = vadd.f32 %v1014, %v1024
      %v1027 = vmul.f32 %v450, %v793
      %v1028 = vmul.f32 %v454, %v794
      %v1029 = vmul.f32 %v460, %v851
      %v1030 = vmul.f32 %v464, %v852
      %v1031 = vadd.f32 %v1027, %v1029
      %v1032 = vadd.f32 %v1028, %v1030
      %v1033 = vmul.f32 %v472, %v909
      %v1034 = vmul.f32 %v476, %v910
      %v1035 = vadd.f32 %v1031, %v1033
      %v1036 = vadd.f32 %v1032, %v1034
      %v1037 = vmul.f32 %v484, %v967
      %v1038 = vmul.f32 %v488, %v968
      %v1039 = vadd.f32 %v1035, %v1037
      %v1040 = vadd.f32 %v1036, %v1038
      %v1041 = vmul.f32 %v496, %v1025
      %v1042 = vmul.f32 %v500, %v1026
      %v1043 = vadd.f32 %v1039, %v1041
      %v1044 = vadd.f32 %v1040, %v1042
      %v1045 = vmul.f32 %v508, %v793
      %v1046 = vmul.f32 %v512, %v794
      %v1047 = vmul.f32 %v518, %v851
      %v1048 = vmul.f32 %v522, %v852
      %v1049 = vadd.f32 %v1045, %v1047
      %v1050 = vadd.f32 %v1046, %v1048
      %v1051 = vmul.f32 %v530, %v909
      %v1052 = vmul.f32 %v534, %v910
      %v1053 = vadd.f32 %v1049, %v1051
      %v1054 = vadd.f32 %v1050, %v1052
      %v1055 = vmul.f32 %v542, %v967
      %v1056 = vmul.f32 %v546, %v968
      %v1057 = vadd.f32 %v1053, %v1055
      %v1058 = vadd.f32 %v1054, %v1056
      %v1059 = vmul.f32 %v554, %v1025
      %v1060 = vmul.f32 %v558, %v1026
      %v1061 = vadd.f32 %v1057, %v1059
      %v1062 = vadd.f32 %v1058, %v1060
      %v1063 = vmul.f32 %v566, %v793
      %v1064 = vmul.f32 %v570, %v794
      %v1065 = vmul.f32 %v576, %v851
      %v1066 = vmul.f32 %v580, %v852
      %v1067 = vadd.f32 %v1063, %v1065
      %v1068 = vadd.f32 %v1064, %v1066
      %v1069 = vmul.f32 %v588, %v909
      %v1070 = vmul.f32 %v592, %v910
      %v1071 = vadd.f32 %v1067, %v1069
      %v1072 = vadd.f32 %v1068, %v1070
      %v1073 = vmul.f32 %v600, %v967
      %v1074 = vmul.f32 %v604, %v968
      %v1075 = vadd.f32 %v1071, %v1073
      %v1076 = vadd.f32 %v1072, %v1074
      %v1077 = vmul.f32 %v612, %v1025
      %v1078 = vmul.f32 %v616, %v1026
      %v1079 = vadd.f32 %v1075, %v1077
      %v1080 = vadd.f32 %v1076, %v1078
      %v1081 = vmul.f32 %v624, %v793
      %v1082 = vmul.f32 %v628, %v794
      %v1083 = vmul.f32 %v634, %v851
      %v1084 = vmul.f32 %v638, %v852
      %v1085 = vadd.f32 %v1081, %v1083
      %v1086 = vadd.f32 %v1082, %v1084
      %v1087 = vmul.f32 %v646, %v909
      %v1088 = vmul.f32 %v650, %v910
      %v1089 = vadd.f32 %v1085, %v1087
      %v1090 = vadd.f32 %v1086, %v1088
      %v1091 = vmul.f32 %v658, %v967
      %v1092 = vmul.f32 %v662, %v968
      %v1093 = vadd.f32 %v1089, %v1091
      %v1094 = vadd.f32 %v1090, %v1092
      %v1095 = vmul.f32 %v670, %v1025
      %v1096 = vmul.f32 %v674, %v1026
      %v1097 = vadd.f32 %v1093, %v1095
      %v1098 = vadd.f32 %v1094, %v1096
      %v1099 = vmul.f32 %v682, %v793
      %v1100 = vmul.f32 %v686, %v794
      %v1101 = vmul.f32 %v692, %v851
      %v1102 = vmul.f32 %v696, %v852
      %v1103 = vadd.f32 %v1099, %v1101
      %v1104 = vadd.f32 %v1100, %v1102
      %v1105 = vmul.f32 %v704, %v909
      %v1106 = vmul.f32 %v708, %v910
      %v1107 = vadd.f32 %v1103, %v1105
      %v1108 = vadd.f32 %v1104, %v1106
      %v1109 = vmul.f32 %v716, %v967
      %v1110 = vmul.f32 %v720, %v968
      %v1111 = vadd.f32 %v1107, %v1109
      %v1112 = vadd.f32 %v1108, %v1110
      %v1113 = vmul.f32 %v728, %v1025
      %v1114 = vmul.f32 %v732, %v1026
      %v1115 = vadd.f32 %v1111, %v1113
      %v1116 = vadd.f32 %v1112, %v1114
      %v1117 = vld [vmem:[%s207] sm:$0xff]
      %v1118 = vld [vmem:[%s207 + $0x8] sm:$0xff]
      %v1119 = vld [vmem:[%s207 + $0x10] sm:$0xff]
      %v1120 = vld [vmem:[%s207 + $0x18] sm:$0xff]
      %v1121 = vld [vmem:[%s207 + $0x20] sm:$0xf]
      %v1122 = vld [vmem:[%s207 + $0x28] sm:$0xf]
      %v1123 = vlaneseq
      %v1124 = vshrl.u32 %v1123, 7
      %v1125 = vsub.s32 0, %v1124
      %v1126 = vrot.slane %v1043, %v1125
      %v1127 = vlaneseq
      %v1128 = vshrl.u32 %v1127, 7
      %v1129 = vsub.s32 0, %v1128
      %v1130 = vrot.slane %v1044, %v1129
      %v1131 = vmul.f32 %v1126, %v1117
      %v1132 = vmul.f32 %v1130, %v1118
      %v1133 = vlaneseq
      %v1134 = vshrl.u32 %v1133, 7
      %v1135 = vsub.s32 1, %v1134
      %v1136 = vrot.slane %v1043, %v1135
      %v1137 = vlaneseq
      %v1138 = vshrl.u32 %v1137, 7
      %v1139 = vsub.s32 1, %v1138
      %v1140 = vrot.slane %v1044, %v1139
      %v1141 = vmul.f32 %v1136, %v1117
      %v1142 = vmul.f32 %v1140, %v1118
      %v1145 = vrot.slane %v1141, 4
      %v1146 = vrot.slane %v1142, 4
      %v1149 = vadd.f32 %v1131, %v1145
      %v1150 = vadd.f32 %v1132, %v1146
      %v1151 = vlaneseq
      %v1152 = vshrl.u32 %v1151, 7
      %v1153 = vsub.s32 2, %v1152
      %v1154 = vrot.slane %v1043, %v1153
      %v1155 = vlaneseq
      %v1156 = vshrl.u32 %v1155, 7
      %v1157 = vsub.s32 2, %v1156
      %v1158 = vrot.slane %v1044, %v1157
      %v1159 = vmul.f32 %v1154, %v1119
      %v1160 = vmul.f32 %v1158, %v1120
      %v1161 = vadd.f32 %v1149, %v1159
      %v1162 = vadd.f32 %v1150, %v1160
      %v1163 = vlaneseq
      %v1164 = vshrl.u32 %v1163, 7
      %v1165 = vsub.s32 3, %v1164
      %v1166 = vrot.slane %v1043, %v1165
      %v1167 = vlaneseq
      %v1168 = vshrl.u32 %v1167, 7
      %v1169 = vsub.s32 3, %v1168
      %v1170 = vrot.slane %v1044, %v1169
      %v1171 = vmul.f32 %v1166, %v1119
      %v1172 = vmul.f32 %v1170, %v1120
      %v1175 = vrot.slane %v1171, 4
      %v1176 = vrot.slane %v1172, 4
      %v1179 = vadd.f32 %v1161, %v1175
      %v1180 = vadd.f32 %v1162, %v1176
      %v1181 = vlaneseq
      %v1182 = vshrl.u32 %v1181, 7
      %v1183 = vsub.s32 4, %v1182
      %v1184 = vrot.slane %v1043, %v1183
      %v1185 = vlaneseq
      %v1186 = vshrl.u32 %v1185, 7
      %v1187 = vsub.s32 4, %v1186
      %v1188 = vrot.slane %v1044, %v1187
      %v1189 = vmul.f32 %v1184, %v1121
      %v1190 = vmul.f32 %v1188, %v1122
      %v1191 = vadd.f32 %v1179, %v1189
      %v1192 = vadd.f32 %v1180, %v1190
      %1193 = vst [vmem:[%s217] sm:$0xf] %v1191
      %1194 = vst [vmem:[%s217 + $0x8] sm:$0xf] %v1192
      %v1195 = vlaneseq
      %v1196 = vshrl.u32 %v1195, 7
      %v1197 = vsub.s32 0, %v1196
      %v1198 = vrot.slane %v1061, %v1197
      %v1199 = vlaneseq
      %v1200 = vshrl.u32 %v1199, 7
      %v1201 = vsub.s32 0, %v1200
      %v1202 = vrot.slane %v1062, %v1201
      %v1203 = vmul.f32 %v1198, %v1117
      %v1204 = vmul.f32 %v1202, %v1118
      %v1205 = vlaneseq
      %v1206 = vshrl.u32 %v1205, 7
      %v1207 = vsub.s32 1, %v1206
      %v1208 = vrot.slane %v1061, %v1207
      %v1209 = vlaneseq
      %v1210 = vshrl.u32 %v1209, 7
      %v1211 = vsub.s32 1, %v1210
      %v1212 = vrot.slane %v1062, %v1211
      %v1213 = vmul.f32 %v1208, %v1117
      %v1214 = vmul.f32 %v1212, %v1118
      %v1217 = vrot.slane %v1213, 4
      %v1218 = vrot.slane %v1214, 4
      %v1221 = vadd.f32 %v1203, %v1217
      %v1222 = vadd.f32 %v1204, %v1218
      %v1223 = vlaneseq
      %v1224 = vshrl.u32 %v1223, 7
      %v1225 = vsub.s32 2, %v1224
      %v1226 = vrot.slane %v1061, %v1225
      %v1227 = vlaneseq
      %v1228 = vshrl.u32 %v1227, 7
      %v1229 = vsub.s32 2, %v1228
      %v1230 = vrot.slane %v1062, %v1229
      %v1231 = vmul.f32 %v1226, %v1119
      %v1232 = vmul.f32 %v1230, %v1120
      %v1233 = vadd.f32 %v1221, %v1231
      %v1234 = vadd.f32 %v1222, %v1232
      %v1235 = vlaneseq
      %v1236 = vshrl.u32 %v1235, 7
      %v1237 = vsub.s32 3, %v1236
      %v1238 = vrot.slane %v1061, %v1237
      %v1239 = vlaneseq
      %v1240 = vshrl.u32 %v1239, 7
      %v1241 = vsub.s32 3, %v1240
      %v1242 = vrot.slane %v1062, %v1241
      %v1243 = vmul.f32 %v1238, %v1119
      %v1244 = vmul.f32 %v1242, %v1120
      %v1247 = vrot.slane %v1243, 4
      %v1248 = vrot.slane %v1244, 4
      %v1251 = vadd.f32 %v1233, %v1247
      %v1252 = vadd.f32 %v1234, %v1248
      %v1253 = vlaneseq
      %v1254 = vshrl.u32 %v1253, 7
      %v1255 = vsub.s32 4, %v1254
      %v1256 = vrot.slane %v1061, %v1255
      %v1257 = vlaneseq
      %v1258 = vshrl.u32 %v1257, 7
      %v1259 = vsub.s32 4, %v1258
      %v1260 = vrot.slane %v1062, %v1259
      %v1261 = vmul.f32 %v1256, %v1121
      %v1262 = vmul.f32 %v1260, %v1122
      %v1263 = vadd.f32 %v1251, %v1261
      %v1264 = vadd.f32 %v1252, %v1262
      %v1267 = vrot.slane %v1263, 4
      %v1268 = vrot.slane %v1264, 4
      %1271 = vst [vmem:[%s217] sm:$0xf0] %v1267
      %1272 = vst [vmem:[%s217 + $0x8] sm:$0xf0] %v1268
      %v1273 = vlaneseq
      %v1274 = vshrl.u32 %v1273, 7
      %v1275 = vsub.s32 0, %v1274
      %v1276 = vrot.slane %v1079, %v1275
      %v1277 = vlaneseq
      %v1278 = vshrl.u32 %v1277, 7
      %v1279 = vsub.s32 0, %v1278
      %v1280 = vrot.slane %v1080, %v1279
      %v1281 = vmul.f32 %v1276, %v1117
      %v1282 = vmul.f32 %v1280, %v1118
      %v1283 = vlaneseq
      %v1284 = vshrl.u32 %v1283, 7
      %v1285 = vsub.s32 1, %v1284
      %v1286 = vrot.slane %v1079, %v1285
      %v1287 = vlaneseq
      %v1288 = vshrl.u32 %v1287, 7
      %v1289 = vsub.s32 1, %v1288
      %v1290 = vrot.slane %v1080, %v1289
      %v1291 = vmul.f32 %v1286, %v1117
      %v1292 = vmul.f32 %v1290, %v1118
      %v1295 = vrot.slane %v1291, 4
      %v1296 = vrot.slane %v1292, 4
      %v1299 = vadd.f32 %v1281, %v1295
      %v1300 = vadd.f32 %v1282, %v1296
      %v1301 = vlaneseq
      %v1302 = vshrl.u32 %v1301, 7
      %v1303 = vsub.s32 2, %v1302
      %v1304 = vrot.slane %v1079, %v1303
      %v1305 = vlaneseq
      %v1306 = vshrl.u32 %v1305, 7
      %v1307 = vsub.s32 2, %v1306
      %v1308 = vrot.slane %v1080, %v1307
      %v1309 = vmul.f32 %v1304, %v1119
      %v1310 = vmul.f32 %v1308, %v1120
      %v1311 = vadd.f32 %v1299, %v1309
      %v1312 = vadd.f32 %v1300, %v1310
      %v1313 = vlaneseq
      %v1314 = vshrl.u32 %v1313, 7
      %v1315 = vsub.s32 3, %v1314
      %v1316 = vrot.slane %v1079, %v1315
      %v1317 = vlaneseq
      %v1318 = vshrl.u32 %v1317, 7
      %v1319 = vsub.s32 3, %v1318
      %v1320 = vrot.slane %v1080, %v1319
      %v1321 = vmul.f32 %v1316, %v1119
      %v1322 = vmul.f32 %v1320, %v1120
      %v1325 = vrot.slane %v1321, 4
      %v1326 = vrot.slane %v1322, 4
      %v1329 = vadd.f32 %v1311, %v1325
      %v1330 = vadd.f32 %v1312, %v1326
      %v1331 = vlaneseq
      %v1332 = vshrl.u32 %v1331, 7
      %v1333 = vsub.s32 4, %v1332
      %v1334 = vrot.slane %v1079, %v1333
      %v1335 = vlaneseq
      %v1336 = vshrl.u32 %v1335, 7
      %v1337 = vsub.s32 4, %v1336
      %v1338 = vrot.slane %v1080, %v1337
      %v1339 = vmul.f32 %v1334, %v1121
      %v1340 = vmul.f32 %v1338, %v1122
      %v1341 = vadd.f32 %v1329, %v1339
      %v1342 = vadd.f32 %v1330, %v1340
      %1343 = vst [vmem:[%s217 + $0x10] sm:$0xf] %v1341
      %1344 = vst [vmem:[%s217 + $0x18] sm:$0xf] %v1342
      %v1345 = vlaneseq
      %v1346 = vshrl.u32 %v1345, 7
      %v1347 = vsub.s32 0, %v1346
      %v1348 = vrot.slane %v1097, %v1347
      %v1349 = vlaneseq
      %v1350 = vshrl.u32 %v1349, 7
      %v1351 = vsub.s32 0, %v1350
      %v1352 = vrot.slane %v1098, %v1351
      %v1353 = vmul.f32 %v1348, %v1117
      %v1354 = vmul.f32 %v1352, %v1118
      %v1355 = vlaneseq
      %v1356 = vshrl.u32 %v1355, 7
      %v1357 = vsub.s32 1, %v1356
      %v1358 = vrot.slane %v1097, %v1357
      %v1359 = vlaneseq
      %v1360 = vshrl.u32 %v1359, 7
      %v1361 = vsub.s32 1, %v1360
      %v1362 = vrot.slane %v1098, %v1361
      %v1363 = vmul.f32 %v1358, %v1117
      %v1364 = vmul.f32 %v1362, %v1118
      %v1367 = vrot.slane %v1363, 4
      %v1368 = vrot.slane %v1364, 4
      %v1371 = vadd.f32 %v1353, %v1367
      %v1372 = vadd.f32 %v1354, %v1368
      %v1373 = vlaneseq
      %v1374 = vshrl.u32 %v1373, 7
      %v1375 = vsub.s32 2, %v1374
      %v1376 = vrot.slane %v1097, %v1375
      %v1377 = vlaneseq
      %v1378 = vshrl.u32 %v1377, 7
      %v1379 = vsub.s32 2, %v1378
      %v1380 = vrot.slane %v1098, %v1379
      %v1381 = vmul.f32 %v1376, %v1119
      %v1382 = vmul.f32 %v1380, %v1120
      %v1383 = vadd.f32 %v1371, %v1381
      %v1384 = vadd.f32 %v1372, %v1382
      %v1385 = vlaneseq
      %v1386 = vshrl.u32 %v1385, 7
      %v1387 = vsub.s32 3, %v1386
      %v1388 = vrot.slane %v1097, %v1387
      %v1389 = vlaneseq
      %v1390 = vshrl.u32 %v1389, 7
      %v1391 = vsub.s32 3, %v1390
      %v1392 = vrot.slane %v1098, %v1391
      %v1393 = vmul.f32 %v1388, %v1119
      %v1394 = vmul.f32 %v1392, %v1120
      %v1397 = vrot.slane %v1393, 4
      %v1398 = vrot.slane %v1394, 4
      %v1401 = vadd.f32 %v1383, %v1397
      %v1402 = vadd.f32 %v1384, %v1398
      %v1403 = vlaneseq
      %v1404 = vshrl.u32 %v1403, 7
      %v1405 = vsub.s32 4, %v1404
      %v1406 = vrot.slane %v1097, %v1405
      %v1407 = vlaneseq
      %v1408 = vshrl.u32 %v1407, 7
      %v1409 = vsub.s32 4, %v1408
      %v1410 = vrot.slane %v1098, %v1409
      %v1411 = vmul.f32 %v1406, %v1121
      %v1412 = vmul.f32 %v1410, %v1122
      %v1413 = vadd.f32 %v1401, %v1411
      %v1414 = vadd.f32 %v1402, %v1412
      %v1417 = vrot.slane %v1413, 4
      %v1418 = vrot.slane %v1414, 4
      %1421 = vst [vmem:[%s217 + $0x10] sm:$0xf0] %v1417
      %1422 = vst [vmem:[%s217 + $0x18] sm:$0xf0] %v1418
      %v1423 = vlaneseq
      %v1424 = vshrl.u32 %v1423, 7
      %v1425 = vsub.s32 0, %v1424
      %v1426 = vrot.slane %v1115, %v1425
      %v1427 = vlaneseq
      %v1428 = vshrl.u32 %v1427, 7
      %v1429 = vsub.s32 0, %v1428
      %v1430 = vrot.slane %v1116, %v1429
      %v1431 = vmul.f32 %v1426, %v1117
      %v1432 = vmul.f32 %v1430, %v1118
      %v1433 = vlaneseq
      %v1434 = vshrl.u32 %v1433, 7
      %v1435 = vsub.s32 1, %v1434
      %v1436 = vrot.slane %v1115, %v1435
      %v1437 = vlaneseq
      %v1438 = vshrl.u32 %v1437, 7
      %v1439 = vsub.s32 1, %v1438
      %v1440 = vrot.slane %v1116, %v1439
      %v1441 = vmul.f32 %v1436, %v1117
      %v1442 = vmul.f32 %v1440, %v1118
      %v1445 = vrot.slane %v1441, 4
      %v1446 = vrot.slane %v1442, 4
      %v1449 = vadd.f32 %v1431, %v1445
      %v1450 = vadd.f32 %v1432, %v1446
      %v1451 = vlaneseq
      %v1452 = vshrl.u32 %v1451, 7
      %v1453 = vsub.s32 2, %v1452
      %v1454 = vrot.slane %v1115, %v1453
      %v1455 = vlaneseq
      %v1456 = vshrl.u32 %v1455, 7
      %v1457 = vsub.s32 2, %v1456
      %v1458 = vrot.slane %v1116, %v1457
      %v1459 = vmul.f32 %v1454, %v1119
      %v1460 = vmul.f32 %v1458, %v1120
      %v1461 = vadd.f32 %v1449, %v1459
      %v1462 = vadd.f32 %v1450, %v1460
      %v1463 = vlaneseq
      %v1464 = vshrl.u32 %v1463, 7
      %v1465 = vsub.s32 3, %v1464
      %v1466 = vrot.slane %v1115, %v1465
      %v1467 = vlaneseq
      %v1468 = vshrl.u32 %v1467, 7
      %v1469 = vsub.s32 3, %v1468
      %v1470 = vrot.slane %v1116, %v1469
      %v1471 = vmul.f32 %v1466, %v1119
      %v1472 = vmul.f32 %v1470, %v1120
      %v1475 = vrot.slane %v1471, 4
      %v1476 = vrot.slane %v1472, 4
      %v1479 = vadd.f32 %v1461, %v1475
      %v1480 = vadd.f32 %v1462, %v1476
      %v1481 = vlaneseq
      %v1482 = vshrl.u32 %v1481, 7
      %v1483 = vsub.s32 4, %v1482
      %v1484 = vrot.slane %v1115, %v1483
      %v1485 = vlaneseq
      %v1486 = vshrl.u32 %v1485, 7
      %v1487 = vsub.s32 4, %v1486
      %v1488 = vrot.slane %v1116, %v1487
      %v1489 = vmul.f32 %v1484, %v1121
      %v1490 = vmul.f32 %v1488, %v1122
      %v1491 = vadd.f32 %v1479, %v1489
      %v1492 = vadd.f32 %v1480, %v1490
      %1493 = vst [vmem:[%s217 + $0x20] sm:$0xf] %v1491
      %1494 = vst [vmem:[%s217 + $0x28] sm:$0xf] %v1492
      %s1495 = smul.u32 2, %s18
      %p1496 = scmp.lt.s32.totalorder %s17, 1
      %s1497 = scalar_select %p1496, %s17, 1
      %p1498 = scmp.lt.s32.totalorder %s1495, 1
      %s1499 = scalar_select %p1498, %s1495, 1
      %s1500 = smul.addr %s1497, 6
      %s1501 = sadd.s32 %s1499, %s1500
      %s1502 = smul.addr %s1501, 8
      %s1503 = scalar_lea.vmem %s2, %s1502
      // Predicated region
      $region29: #{tpu_custom_call.1} parent=27 // pred_check
        %p1504 = pneg %p101
      $region30: #{tpu_custom_call.1} parent=27 // pred_check_branch
        %1506 = sbr.rel (%p1504) target = $region32
      $region31: #{tpu_custom_call.1} parent=27 // pred_region
        %s1507 = smul.u32 2, %s18
      $region32: #{tpu_custom_call.1} parent=27 // pred_fallthru
        _
    $region28: #{tpu_custom_call.1} parent=5 // pred_fallthru
      _
    %p1508 = scmp.le.s32.totalorder 2, %s8
    // Predicated region
    $region33: #{tpu_custom_call.1} parent=5 // pred_check
      %p1509 = pneg %p1508
    $region34: #{tpu_custom_call.1} parent=5 // pred_check_branch
      %1511 = sbr.rel (%p1509) target = $region36
    $region35: #{tpu_custom_call.1} parent=5 // pred_region
      %s1512 = ssub.s32 %s8, 2
      // Predicated region
      $region37: #{tpu_custom_call.1} parent=35 // pred_check
        %p1513 = pneg %p107
      $region38: #{tpu_custom_call.1} parent=35 // pred_check_branch
        %1515 = sbr.rel (%p1513) target = $region40
      $region39: #{tpu_custom_call.1} parent=35 // pred_region
        %s1516 = smul.u32 2, %s20
        %p1517 = scmp.lt.s32.totalorder %s19, 1
        %s1518 = scalar_select %p1517, %s19, 1
        %p1519 = scmp.lt.s32.totalorder %s1516, 1
        %s1520 = scalar_select %p1519, %s1516, 1
        %s1521 = smul.addr %s1518, 6
        %s1522 = sadd.s32 %s1520, %s1521
        %s1523 = smul.addr %s1522, 8
        %s1524 = scalar_lea.vmem %s2, %s1523
      $region40: #{tpu_custom_call.1} parent=35 // pred_fallthru
        _
    $region36: #{tpu_custom_call.1} parent=5 // pred_fallthru
      _
  $region6: #{tpu_custom_call.1} parent=0 // loop_footer
    %s12 = sadd.s32 1, %s8
  $region7: #{tpu_custom_call.1} parent=0 // loop_footer_branch
    %7 = sbr.rel target = $region3
  $region8: #{tpu_custom_call.1} parent=0 // loop_exit
    _

</llo_original>
